<compile_context>
chip_gen: v5e
topology: v5e:2x2
jax: 0.10.0
libtpu: 0.0.40
codegen_flags: <defaults>
</compile_context>

<pallas_src>
import functools

import jax
import jax.numpy as jnp
from jax import lax
from jax.experimental import pallas as pl
from jax.experimental.pallas import tpu as pltpu


_NEG_BIG = -1e30  # finite "-inf": keeps the online logsumexp NaN-free


def _round_up(a, b):
    return (a + b - 1) // b * b


def _cdiv(a, b):
    return (a + b - 1) // b


def _flce_kernel(x_ref, w_ref, b_ref, lse_ref, z_ref, m_sc, d_sc,
                 *, vocab_size: int, block_v: int, label_smoothing: float):
    """One (row-block i, vocab-block j) step of the fused linear + CE loss.

    x_ref:   (H,  TN) bf16  resident activations (transposed; single-buffered)
    w_ref:   (TV, H)  bf16  streamed weight tile
    b_ref:   (TV, 1)  f32   streamed bias tile
    lse_ref: (1,  TN) f32   per-row logsumexp (written at the last vocab step)
    z_ref:   (1,  TN) f32   per-row sum_v logits (label-smoothing z-term)
    m_sc/d_sc: (1, TN) f32  online-softmax running max / denominator
    """
    j = pl.program_id(1)
    nv = pl.num_programs(1)

    @pl.when(j == 0)
    def _init():
        m_sc[...] = jnp.full_like(m_sc, _NEG_BIG)
        d_sc[...] = jnp.zeros_like(d_sc)
        z_ref[...] = jnp.zeros_like(z_ref)

    # (TV, TN) logits tile: canonical MXU matmul, bf16 inputs / f32 accumulate.
    logits = jnp.dot(w_ref[...], x_ref[...], preferred_element_type=jnp.float32)
    logits = logits + b_ref[...]                       # (TV,1) broadcasts over lanes

    ragged = (vocab_size % block_v) != 0               # static Python bool
    if ragged:
        vid = lax.broadcasted_iota(jnp.int32, (block_v, 1), 0) + j * block_v
        valid_v = vid < vocab_size                     # (TV, 1)

    if label_smoothing > 0.0:
        z_tile = jnp.where(valid_v, logits, 0.0) if ragged else logits
        z_ref[...] += jnp.sum(z_tile, axis=0, keepdims=True)

    if ragged:
        logits = jnp.where(valid_v, logits, _NEG_BIG)

    # Online logsumexp over the streamed vocab axis.
    m_prev = m_sc[...]
    m_new = jnp.maximum(m_prev, jnp.max(logits, axis=0, keepdims=True))
    d_sc[...] = d_sc[...] * jnp.exp(m_prev - m_new) + jnp.sum(
        jnp.exp(logits - m_new), axis=0, keepdims=True)
    m_sc[...] = m_new

    @pl.when(j == nv - 1)
    def _finalize():
        lse_ref[...] = m_sc[...] + jnp.log(d_sc[...])


def _pick_tiles(N, H, V, block_rows, block_v, vmem_budget_bytes):
    """Choose (TN, TV) and estimate VMEM usage."""
    # Row tile: lane dim of the per-row outputs -> multiple of 128.
    if block_rows is None:
        if N >= 1024:
            tn = 512
        else:
            # Keep >=2 row blocks when possible (dual-TC parts) with low padding.
            tn = max(128, _round_up(_cdiv(N, 2), 128))
    else:
        tn = max(128, _round_up(block_rows, 128))
    tn = min(tn, max(128, _round_up(N, 128)))

    # Vocab tile: sublane dim -> multiple of 8 (prefer 256-multiples for the MXU);
    # scaled with H so each streamed bf16 weight tile is >= ~2 MiB.
    if block_v is None:
        tv = max(512, _round_up(_cdiv(2 << 20, 2 * H), 256))
        tv = min(tv, 2048)
        tv = min(tv, _round_up(V, 256))
    else:
        tv = min(max(8, _round_up(block_v, 8)), _round_up(V, 8))

    def usage(tn_, tv_):
        w = 2 * tv_ * H * 2          # double-buffered bf16 weight tiles
        xb = tn_ * H * 2             # single-buffered resident x tile
        tmp = 4 * tv_ * tn_ * 4      # f32 logits tile + elementwise temps (est.)
        return w + xb + tmp + (1 << 20)

    # Shrink to the conservative budget (fits v7x's 64 MiB VMEM).
    while usage(tn, tv) > vmem_budget_bytes and tv > 256:
        tv = max(256, tv // 2)
    while usage(tn, tv) > vmem_budget_bytes and tn > 128:
        tn -= 128
    return tn, tv, usage(tn, tv)


def fused_linear_cross_entropy_loss(x, target, weight, bias=None,
                                    ignore_index=-100, label_smoothing=0.0,
                                    reduction="mean",
                                    block_rows=None, block_v=None,
                                    vmem_budget_bytes=48 << 20,
                                    vmem_limit_bytes=None):
    """Scalar loss matching PyTorch FusedLinearCrossEntropyLoss.forward."""
    N, H = x.shape
    V = weight.shape[0]

    tn, tv, vmem_est = _pick_tiles(N, H, V, block_rows, block_v, vmem_budget_bytes)
    n_pad = _round_up(N, tn)
    v_pad = _round_up(V, tv)
    grid = (n_pad // tn, v_pad // tv)

    # bf16 matmul operands (cast only if needed); all softmax math stays f32.
    x_bf = x if x.dtype == jnp.bfloat16 else x.astype(jnp.bfloat16)
    w_bf = weight if weight.dtype == jnp.bfloat16 else weight.astype(jnp.bfloat16)
    b_f32 = (jnp.zeros((V,), jnp.float32) if bias is None
             else bias.astype(jnp.float32))

    # x transposed once -> canonical (TV,H)@(H,TN) matmul inside the kernel.
    xt = x_bf.T
    if n_pad != N:
        xt = jnp.pad(xt, ((0, 0), (0, n_pad - N)))
    w_p = w_bf if v_pad == V else jnp.pad(w_bf, ((0, v_pad - V), (0, 0)))
    b_col = b_f32.reshape(V, 1)
    b_p = b_col if v_pad == V else jnp.pad(b_col, ((0, v_pad - V), (0, 0)))

    kernel = functools.partial(
        _flce_kernel, vocab_size=int(V), block_v=int(tv),
        label_smoothing=float(label_smoothing))

    if vmem_limit_bytes is None:
        vmem_limit_bytes = max(32 << 20, min(64 << 20, vmem_est + (16 << 20)))

    def _call(single_buffer_x):
        if single_buffer_x:
            # x only changes once per vocab sweep -> no double buffer needed.
            x_spec = pl.BlockSpec((H, tn), lambda i, j: (0, i),
                                  pipeline_mode=pl.Buffered(1))
        else:
            x_spec = pl.BlockSpec((H, tn), lambda i, j: (0, i))
        return pl.pallas_call(
            kernel,
            out_shape=(jax.ShapeDtypeStruct((1, n_pad), jnp.float32),
                       jax.ShapeDtypeStruct((1, n_pad), jnp.float32)),
            grid_spec=pltpu.PrefetchScalarGridSpec(
                num_scalar_prefetch=0,
                grid=grid,
                in_specs=[
                    x_spec,                                      # resident x (H, TN)
                    pl.BlockSpec((tv, H), lambda i, j: (j, 0)),  # streamed weight
                    pl.BlockSpec((tv, 1), lambda i, j: (j, 0)),  # streamed bias
                ],
                out_specs=[pl.BlockSpec((1, tn), lambda i, j: (0, i)),   # lse
                           pl.BlockSpec((1, tn), lambda i, j: (0, i))],  # sum_v logits
                scratch_shapes=[pltpu.VMEM((1, tn), jnp.float32)] * 2,
            ),
            compiler_params=pltpu.CompilerParams(
                dimension_semantics=("parallel", "arbitrary"),
                vmem_limit_bytes=int(vmem_limit_bytes)),
        )(xt, w_p, b_p)

    try:
        lse_pad, z_pad = _call(True)
    except Exception:  # pragma: no cover - fallback if Buffered(1) unsupported
        lse_pad, z_pad = _call(False)

    lse = lse_pad[0, :N]

    # Target logit via an O(N*H) row gather (kept out of the streamed kernel).
    tgt = target.astype(jnp.int32)
    safe_t = jnp.where(tgt == ignore_index, 0, tgt)
    w_rows = jnp.take(w_bf, safe_t, axis=0).astype(jnp.float32)     # (N, H)
    x_t = jnp.sum(x_bf.astype(jnp.float32) * w_rows, axis=1) + b_f32[safe_t]

    loss_rows = lse - x_t                       # -(x_t - lse)
    if label_smoothing > 0.0:
        eps = label_smoothing / V
        z = -eps * z_pad[0, :N]                 # z_n = -eps * sum_v logits[n, v]
        loss_rows = loss_rows * (1.0 - label_smoothing) + (z + label_smoothing * lse)

    valid = tgt != ignore_index
    loss_rows = jnp.where(valid, loss_rows, 0.0)
    loss = jnp.sum(loss_rows)
    if reduction == "mean":
        total = jnp.sum(valid).astype(jnp.float32)
        loss = loss / jnp.maximum(total, 1.0)
    # 'sum' (and 'none') return the summed scalar, matching the reference
    # fused_linear_cross_entropy_forward's final `loss.sum()`.
    return loss


def _reference_loss(x, target, weight, bias, ignore_index, label_smoothing, reduction):
    # Same bf16-rounded matmul inputs as the kernel -> apples-to-apples.
    xf = x.astype(jnp.bfloat16).astype(jnp.float32)
    wf = weight.astype(jnp.bfloat16).astype(jnp.float32)
    bf = (jnp.zeros((weight.shape[0],), jnp.float32) if bias is None
          else bias.astype(jnp.float32))
    logits = xf @ wf.T + bf[None, :]
    V = logits.shape[1]
    m = jnp.max(logits, axis=1)
    d = jnp.sum(jnp.exp(logits - m[:, None]), axis=1)
    lse = m + jnp.log(d)
    safe_t = jnp.where(target == ignore_index, 0, target)
    x_t = jnp.take_along_axis(logits, safe_t[:, None], axis=1)[:, 0]
    loss = -(x_t - lse)
    if label_smoothing > 0.0:
        eps = label_smoothing / V
        z = jnp.sum(-eps * logits, axis=1)
        loss = loss * (1.0 - label_smoothing) + (z + label_smoothing * lse)
    valid = target != ignore_index
    loss = jnp.where(valid, loss, 0.0)
    total = jnp.sum(valid).astype(jnp.float32)
    loss = jnp.sum(loss)
    if reduction == "mean":
        loss = loss / jnp.maximum(total, 1.0)
    return loss


if __name__ == "__main__":
    # Small deterministic example: batch=2, seq=8 -> N=16 rows, hidden=128,
    # vocab=2048 (case 1 uses a 512 vocab tile -> 4 streamed V-tiles exercising
    # the online logsumexp; case 2 uses a ragged V=1000 to exercise the
    # in-kernel vocab masking and the auto-tiling path).
    key = jax.random.PRNGKey(0)
    kx, kw, kb, kt = jax.random.split(key, 4)

    N, H, V = 16, 128, 2048
    ignore_index = -100

    x = jax.random.normal(kx, (N, H), dtype=jnp.float32)
    weight = jax.random.normal(kw, (V, H), dtype=jnp.float32) * 0.02
    bias = jax.random.normal(kb, (V,), dtype=jnp.float32) * 0.01
    target = jax.random.randint(kt, (N,), 0, V, dtype=jnp.int32)
    target = target.at[3].set(ignore_index).at[11].set(ignore_index)

    # Case 1: mean reduction + label smoothing, explicit small tiles.
    loss = fused_linear_cross_entropy_loss(
        x, target, weight, bias,
        ignore_index=ignore_index, label_smoothing=0.1, reduction="mean",
        block_rows=128, block_v=512)
    loss = jax.block_until_ready(loss)
    ref = _reference_loss(x, target, weight, bias, ignore_index, 0.1, "mean")
    assert jnp.allclose(loss, ref, rtol=1e-4, atol=1e-4), (loss, ref)

    # Case 2: ragged vocab (not a multiple of the tile), sum reduction,
    # no smoothing, fully automatic tiling.
    V2 = 1000
    w2, b2 = weight[:V2], bias[:V2]
    t2 = jnp.clip(target, 0, V2 - 1).at[3].set(ignore_index)
    loss2 = fused_linear_cross_entropy_loss(
        x, t2, w2, b2,
        ignore_index=ignore_index, label_smoothing=0.0, reduction="sum")
    loss2 = jax.block_until_ready(loss2)
    ref2 = _reference_loss(x, t2, w2, b2, ignore_index, 0.0, "sum")
    assert jnp.allclose(loss2, ref2, rtol=1e-4, atol=1e-4), (loss2, ref2)

    print("KERNEL_OK")
</pallas_src>

<mosaic_0001>
module attributes {stable_mosaic.version = 11 : i64} {
  func.func @_flce_kernel(%arg0: i32, %arg1: i32, %arg2: memref<128x128xbf16, #tpu.memory_space<vmem>>, %arg3: memref<512x128xbf16, #tpu.memory_space<vmem>>, %arg4: memref<512x1xf32, #tpu.memory_space<vmem>>, %arg5: memref<1x128xf32, #tpu.memory_space<vmem>>, %arg6: memref<1x128xf32, #tpu.memory_space<vmem>>, %arg7: memref<1x128xf32, #tpu.memory_space<vmem>>, %arg8: memref<1x128xf32, #tpu.memory_space<vmem>>) attributes {dimension_semantics = [#tpu.dimension_semantics<parallel>, #tpu.dimension_semantics<arbitrary>], iteration_bounds = array<i64: 1, 4>, scalar_prefetch = 0 : i64, scratch_operands = 2 : i64, tpu.core_type = #tpu.core_type<tc>, window_params = [{pipeline_mode = #tpu.pipeline_mode<synchronous>, transform_indices = @transform_0, window_bounds = array<i64: 128, 128>}, {transform_indices = @transform_1, window_bounds = array<i64: 512, 128>}, {transform_indices = @transform_2, window_bounds = array<i64: 512, 1>}, {transform_indices = @transform_3, window_bounds = array<i64: 1, 128>}, {transform_indices = @transform_4, window_bounds = array<i64: 1, 128>}]} {
    %c0_i32 = arith.constant 0 : i32
    %0 = arith.cmpi eq, %arg1, %c0_i32 : i32
    %1 = arith.extui %0 : i1 to i32
    %c0_i32_0 = arith.constant 0 : i32
    %2 = arith.cmpi ne, %1, %c0_i32_0 : i32
    scf.if %2 {
      %cst_22 = arith.constant -1.000000e+30 : f32
      %33 = vector.broadcast %cst_22 : f32 to vector<1x128xf32>
      %c0_23 = arith.constant 0 : index
      %c0_24 = arith.constant 0 : index
      %34 = vector.load %arg7[%c0_23, %c0_24] : memref<1x128xf32, #tpu.memory_space<vmem>>, vector<1x128xf32>
      tpu.vector_store %arg7[%c0_23, %c0_24], %33 {strides = array<i32>} : memref<1x128xf32, #tpu.memory_space<vmem>>, vector<1x128xf32>,
      %cst_25 = arith.constant 0.000000e+00 : f32
      %35 = vector.broadcast %cst_25 : f32 to vector<1x128xf32>
      %c0_26 = arith.constant 0 : index
      %c0_27 = arith.constant 0 : index
      %36 = vector.load %arg8[%c0_26, %c0_27] : memref<1x128xf32, #tpu.memory_space<vmem>>, vector<1x128xf32>
      tpu.vector_store %arg8[%c0_26, %c0_27], %35 {strides = array<i32>} : memref<1x128xf32, #tpu.memory_space<vmem>>, vector<1x128xf32>,
      %cst_28 = arith.constant 0.000000e+00 : f32
      %37 = vector.broadcast %cst_28 : f32 to vector<1x128xf32>
      %c0_29 = arith.constant 0 : index
      %c0_30 = arith.constant 0 : index
      %38 = vector.load %arg6[%c0_29, %c0_30] : memref<1x128xf32, #tpu.memory_space<vmem>>, vector<1x128xf32>
      tpu.vector_store %arg6[%c0_29, %c0_30], %37 {strides = array<i32>} : memref<1x128xf32, #tpu.memory_space<vmem>>, vector<1x128xf32>,
    } else {
    }
    %c0 = arith.constant 0 : index
    %c0_1 = arith.constant 0 : index
    %3 = vector.load %arg3[%c0, %c0_1] : memref<512x128xbf16, #tpu.memory_space<vmem>>, vector<512x128xbf16>
    %c0_2 = arith.constant 0 : index
    %c0_3 = arith.constant 0 : index
    %4 = vector.load %arg2[%c0_2, %c0_3] : memref<128x128xbf16, #tpu.memory_space<vmem>>, vector<128x128xbf16>
    %cst = arith.constant dense<0.000000e+00> : vector<512x128xf32>
    %5 = tpu.matmul %3, %4, %cst {dimension_numbers = #tpu.dot_dimension_numbers<[1], [0], [0], [1], [0, 0, 1, 1], [], []>} : vector<512x128xbf16>, vector<128x128xbf16>, vector<512x128xf32> -> vector<512x128xf32>
    %c0_4 = arith.constant 0 : index
    %c0_5 = arith.constant 0 : index
    %6 = vector.load %arg4[%c0_4, %c0_5] : memref<512x1xf32, #tpu.memory_space<vmem>>, vector<512x1xf32>
    %7 = vector.broadcast %6 : vector<512x1xf32> to vector<512x128xf32>
    %8 = arith.addf %5, %7 : vector<512x128xf32>
    %c0_6 = arith.constant 0 : index
    %c0_7 = arith.constant 0 : index
    %9 = vector.load %arg6[%c0_6, %c0_7] : memref<1x128xf32, #tpu.memory_space<vmem>>, vector<1x128xf32>
    %cst_8 = arith.constant dense<0.000000e+00> : vector<128xf32>
    %10 = vector.multi_reduction <add>, %8, %cst_8 [0] : vector<512x128xf32> to vector<128xf32>
    %11 = vector.shape_cast %10 : vector<128xf32> to vector<1x128xf32>
    %12 = arith.addf %9, %11 : vector<1x128xf32>
    %c0_9 = arith.constant 0 : index
    %c0_10 = arith.constant 0 : index
    %13 = vector.load %arg6[%c0_9, %c0_10] : memref<1x128xf32, #tpu.memory_space<vmem>>, vector<1x128xf32>
    tpu.vector_store %arg6[%c0_9, %c0_10], %12 {strides = array<i32>} : memref<1x128xf32, #tpu.memory_space<vmem>>, vector<1x128xf32>,
    %c0_11 = arith.constant 0 : index
    %c0_12 = arith.constant 0 : index
    %14 = vector.load %arg7[%c0_11, %c0_12] : memref<1x128xf32, #tpu.memory_space<vmem>>, vector<1x128xf32>
    %cst_13 = arith.constant dense<0xFF800000> : vector<128xf32>
    %15 = vector.multi_reduction <maximumf>, %8, %cst_13 [0] : vector<512x128xf32> to vector<128xf32>
    %16 = vector.shape_cast %15 : vector<128xf32> to vector<1x128xf32>
    %17 = arith.maximumf %14, %16 : vector<1x128xf32>
    %c0_14 = arith.constant 0 : index
    %c0_15 = arith.constant 0 : index
    %18 = vector.load %arg8[%c0_14, %c0_15] : memref<1x128xf32, #tpu.memory_space<vmem>>, vector<1x128xf32>
    %19 = arith.subf %14, %17 : vector<1x128xf32>
    %20 = math.exp %19 : vector<1x128xf32>
    %21 = arith.mulf %18, %20 : vector<1x128xf32>
    %22 = vector.broadcast %17 : vector<1x128xf32> to vector<512x128xf32>
    %23 = arith.subf %8, %22 : vector<512x128xf32>
    %24 = math.exp %23 : vector<512x128xf32>
    %cst_16 = arith.constant dense<0.000000e+00> : vector<128xf32>
    %25 = vector.multi_reduction <add>, %24, %cst_16 [0] : vector<512x128xf32> to vector<128xf32>
    %26 = vector.shape_cast %25 : vector<128xf32> to vector<1x128xf32>
    %27 = arith.addf %21, %26 : vector<1x128xf32>
    %c0_17 = arith.constant 0 : index
    %c0_18 = arith.constant 0 : index
    %28 = vector.load %arg8[%c0_17, %c0_18] : memref<1x128xf32, #tpu.memory_space<vmem>>, vector<1x128xf32>
    tpu.vector_store %arg8[%c0_17, %c0_18], %27 {strides = array<i32>} : memref<1x128xf32, #tpu.memory_space<vmem>>, vector<1x128xf32>,
    %c0_19 = arith.constant 0 : index
    %c0_20 = arith.constant 0 : index
    %29 = vector.load %arg7[%c0_19, %c0_20] : memref<1x128xf32, #tpu.memory_space<vmem>>, vector<1x128xf32>
    tpu.vector_store %arg7[%c0_19, %c0_20], %17 {strides = array<i32>} : memref<1x128xf32, #tpu.memory_space<vmem>>, vector<1x128xf32>,
    %c3_i32 = arith.constant 3 : i32
    %30 = arith.cmpi eq, %arg1, %c3_i32 : i32
    %31 = arith.extui %30 : i1 to i32
    %c0_i32_21 = arith.constant 0 : i32
    %32 = arith.cmpi ne, %31, %c0_i32_21 : i32
    scf.if %32 {
      %c0_22 = arith.constant 0 : index
      %c0_23 = arith.constant 0 : index
      %33 = vector.load %arg7[%c0_22, %c0_23] : memref<1x128xf32, #tpu.memory_space<vmem>>, vector<1x128xf32>
      %c0_24 = arith.constant 0 : index
      %c0_25 = arith.constant 0 : index
      %34 = vector.load %arg8[%c0_24, %c0_25] : memref<1x128xf32, #tpu.memory_space<vmem>>, vector<1x128xf32>
      %35 = math.log %34 : vector<1x128xf32>
      %36 = arith.addf %33, %35 : vector<1x128xf32>
      %c0_26 = arith.constant 0 : index
      %c0_27 = arith.constant 0 : index
      %37 = vector.load %arg5[%c0_26, %c0_27] : memref<1x128xf32, #tpu.memory_space<vmem>>, vector<1x128xf32>
      tpu.vector_store %arg5[%c0_26, %c0_27], %36 {strides = array<i32>} : memref<1x128xf32, #tpu.memory_space<vmem>>, vector<1x128xf32>,
    } else {
    }
    return
  }
  func.func @transform_0(%arg0: i32, %arg1: i32) -> (i32, i32) {
    %c0_i32 = arith.constant 0 : i32
    %c0_i32_0 = arith.constant 0 : i32
    return %c0_i32, %arg0 : i32, i32
  }
  func.func @transform_1(%arg0: i32, %arg1: i32) -> (i32, i32) {
    %c0_i32 = arith.constant 0 : i32
    %c0_i32_0 = arith.constant 0 : i32
    return %arg1, %c0_i32 : i32, i32
  }
  func.func @transform_2(%arg0: i32, %arg1: i32) -> (i32, i32) {
    %c0_i32 = arith.constant 0 : i32
    %c0_i32_0 = arith.constant 0 : i32
    return %arg1, %c0_i32 : i32, i32
  }
  func.func @transform_3(%arg0: i32, %arg1: i32) -> (i32, i32) {
    %c0_i32 = arith.constant 0 : i32
    %c0_i32_0 = arith.constant 0 : i32
    return %c0_i32, %arg0 : i32, i32
  }
  func.func @transform_4(%arg0: i32, %arg1: i32) -> (i32, i32) {
    %c0_i32 = arith.constant 0 : i32
    %c0_i32_0 = arith.constant 0 : i32
    return %c0_i32, %arg0 : i32, i32
  }
}

module attributes {stable_mosaic.version = 11 : i64} {
  func.func @_flce_kernel(%arg0: i32, %arg1: i32, %arg2: memref<128x128xbf16, #tpu.memory_space<vmem>>, %arg3: memref<512x128xbf16, #tpu.memory_space<vmem>>, %arg4: memref<512x1xf32, #tpu.memory_space<vmem>>, %arg5: memref<1x128xf32, #tpu.memory_space<vmem>>, %arg6: memref<1x128xf32, #tpu.memory_space<vmem>>, %arg7: memref<1x128xf32, #tpu.memory_space<vmem>>, %arg8: memref<1x128xf32, #tpu.memory_space<vmem>>) attributes {dimension_semantics = [#tpu.dimension_semantics<parallel>, #tpu.dimension_semantics<arbitrary>], iteration_bounds = array<i64: 1, 4>, scalar_prefetch = 0 : i64, scratch_operands = 2 : i64, tpu.core_type = #tpu.core_type<tc>, window_params = [{transform_indices = @transform_0, window_bounds = array<i64: 128, 128>}, {transform_indices = @transform_1, window_bounds = array<i64: 512, 128>}, {transform_indices = @transform_2, window_bounds = array<i64: 512, 1>}, {transform_indices = @transform_3, window_bounds = array<i64: 1, 128>}, {transform_indices = @transform_4, window_bounds = array<i64: 1, 128>}]} {
    %c0_i32 = arith.constant 0 : i32
    %0 = arith.cmpi eq, %arg1, %c0_i32 : i32
    %1 = arith.extui %0 : i1 to i32
    %c0_i32_0 = arith.constant 0 : i32
    %2 = arith.cmpi ne, %1, %c0_i32_0 : i32
    scf.if %2 {
      %cst_22 = arith.constant -1.000000e+30 : f32
      %33 = vector.broadcast %cst_22 : f32 to vector<1x128xf32>
      %c0_23 = arith.constant 0 : index
      %c0_24 = arith.constant 0 : index
      %34 = vector.load %arg7[%c0_23, %c0_24] : memref<1x128xf32, #tpu.memory_space<vmem>>, vector<1x128xf32>
      tpu.vector_store %arg7[%c0_23, %c0_24], %33 {strides = array<i32>} : memref<1x128xf32, #tpu.memory_space<vmem>>, vector<1x128xf32>,
      %cst_25 = arith.constant 0.000000e+00 : f32
      %35 = vector.broadcast %cst_25 : f32 to vector<1x128xf32>
      %c0_26 = arith.constant 0 : index
      %c0_27 = arith.constant 0 : index
      %36 = vector.load %arg8[%c0_26, %c0_27] : memref<1x128xf32, #tpu.memory_space<vmem>>, vector<1x128xf32>
      tpu.vector_store %arg8[%c0_26, %c0_27], %35 {strides = array<i32>} : memref<1x128xf32, #tpu.memory_space<vmem>>, vector<1x128xf32>,
      %cst_28 = arith.constant 0.000000e+00 : f32
      %37 = vector.broadcast %cst_28 : f32 to vector<1x128xf32>
      %c0_29 = arith.constant 0 : index
      %c0_30 = arith.constant 0 : index
      %38 = vector.load %arg6[%c0_29, %c0_30] : memref<1x128xf32, #tpu.memory_space<vmem>>, vector<1x128xf32>
      tpu.vector_store %arg6[%c0_29, %c0_30], %37 {strides = array<i32>} : memref<1x128xf32, #tpu.memory_space<vmem>>, vector<1x128xf32>,
    } else {
    }
    %c0 = arith.constant 0 : index
    %c0_1 = arith.constant 0 : index
    %3 = vector.load %arg3[%c0, %c0_1] : memref<512x128xbf16, #tpu.memory_space<vmem>>, vector<512x128xbf16>
    %c0_2 = arith.constant 0 : index
    %c0_3 = arith.constant 0 : index
    %4 = vector.load %arg2[%c0_2, %c0_3] : memref<128x128xbf16, #tpu.memory_space<vmem>>, vector<128x128xbf16>
    %cst = arith.constant dense<0.000000e+00> : vector<512x128xf32>
    %5 = tpu.matmul %3, %4, %cst {dimension_numbers = #tpu.dot_dimension_numbers<[1], [0], [0], [1], [0, 0, 1, 1], [], []>} : vector<512x128xbf16>, vector<128x128xbf16>, vector<512x128xf32> -> vector<512x128xf32>
    %c0_4 = arith.constant 0 : index
    %c0_5 = arith.constant 0 : index
    %6 = vector.load %arg4[%c0_4, %c0_5] : memref<512x1xf32, #tpu.memory_space<vmem>>, vector<512x1xf32>
    %7 = vector.broadcast %6 : vector<512x1xf32> to vector<512x128xf32>
    %8 = arith.addf %5, %7 : vector<512x128xf32>
    %c0_6 = arith.constant 0 : index
    %c0_7 = arith.constant 0 : index
    %9 = vector.load %arg6[%c0_6, %c0_7] : memref<1x128xf32, #tpu.memory_space<vmem>>, vector<1x128xf32>
    %cst_8 = arith.constant dense<0.000000e+00> : vector<128xf32>
    %10 = vector.multi_reduction <add>, %8, %cst_8 [0] : vector<512x128xf32> to vector<128xf32>
    %11 = vector.shape_cast %10 : vector<128xf32> to vector<1x128xf32>
    %12 = arith.addf %9, %11 : vector<1x128xf32>
    %c0_9 = arith.constant 0 : index
    %c0_10 = arith.constant 0 : index
    %13 = vector.load %arg6[%c0_9, %c0_10] : memref<1x128xf32, #tpu.memory_space<vmem>>, vector<1x128xf32>
    tpu.vector_store %arg6[%c0_9, %c0_10], %12 {strides = array<i32>} : memref<1x128xf32, #tpu.memory_space<vmem>>, vector<1x128xf32>,
    %c0_11 = arith.constant 0 : index
    %c0_12 = arith.constant 0 : index
    %14 = vector.load %arg7[%c0_11, %c0_12] : memref<1x128xf32, #tpu.memory_space<vmem>>, vector<1x128xf32>
    %cst_13 = arith.constant dense<0xFF800000> : vector<128xf32>
    %15 = vector.multi_reduction <maximumf>, %8, %cst_13 [0] : vector<512x128xf32> to vector<128xf32>
    %16 = vector.shape_cast %15 : vector<128xf32> to vector<1x128xf32>
    %17 = arith.maximumf %14, %16 : vector<1x128xf32>
    %c0_14 = arith.constant 0 : index
    %c0_15 = arith.constant 0 : index
    %18 = vector.load %arg8[%c0_14, %c0_15] : memref<1x128xf32, #tpu.memory_space<vmem>>, vector<1x128xf32>
    %19 = arith.subf %14, %17 : vector<1x128xf32>
    %20 = math.exp %19 : vector<1x128xf32>
    %21 = arith.mulf %18, %20 : vector<1x128xf32>
    %22 = vector.broadcast %17 : vector<1x128xf32> to vector<512x128xf32>
    %23 = arith.subf %8, %22 : vector<512x128xf32>
    %24 = math.exp %23 : vector<512x128xf32>
    %cst_16 = arith.constant dense<0.000000e+00> : vector<128xf32>
    %25 = vector.multi_reduction <add>, %24, %cst_16 [0] : vector<512x128xf32> to vector<128xf32>
    %26 = vector.shape_cast %25 : vector<128xf32> to vector<1x128xf32>
    %27 = arith.addf %21, %26 : vector<1x128xf32>
    %c0_17 = arith.constant 0 : index
    %c0_18 = arith.constant 0 : index
    %28 = vector.load %arg8[%c0_17, %c0_18] : memref<1x128xf32, #tpu.memory_space<vmem>>, vector<1x128xf32>
    tpu.vector_store %arg8[%c0_17, %c0_18], %27 {strides = array<i32>} : memref<1x128xf32, #tpu.memory_space<vmem>>, vector<1x128xf32>,
    %c0_19 = arith.constant 0 : index
    %c0_20 = arith.constant 0 : index
    %29 = vector.load %arg7[%c0_19, %c0_20] : memref<1x128xf32, #tpu.memory_space<vmem>>, vector<1x128xf32>
    tpu.vector_store %arg7[%c0_19, %c0_20], %17 {strides = array<i32>} : memref<1x128xf32, #tpu.memory_space<vmem>>, vector<1x128xf32>,
    %c3_i32 = arith.constant 3 : i32
    %30 = arith.cmpi eq, %arg1, %c3_i32 : i32
    %31 = arith.extui %30 : i1 to i32
    %c0_i32_21 = arith.constant 0 : i32
    %32 = arith.cmpi ne, %31, %c0_i32_21 : i32
    scf.if %32 {
      %c0_22 = arith.constant 0 : index
      %c0_23 = arith.constant 0 : index
      %33 = vector.load %arg7[%c0_22, %c0_23] : memref<1x128xf32, #tpu.memory_space<vmem>>, vector<1x128xf32>
      %c0_24 = arith.constant 0 : index
      %c0_25 = arith.constant 0 : index
      %34 = vector.load %arg8[%c0_24, %c0_25] : memref<1x128xf32, #tpu.memory_space<vmem>>, vector<1x128xf32>
      %35 = math.log %34 : vector<1x128xf32>
      %36 = arith.addf %33, %35 : vector<1x128xf32>
      %c0_26 = arith.constant 0 : index
      %c0_27 = arith.constant 0 : index
      %37 = vector.load %arg5[%c0_26, %c0_27] : memref<1x128xf32, #tpu.memory_space<vmem>>, vector<1x128xf32>
      tpu.vector_store %arg5[%c0_26, %c0_27], %36 {strides = array<i32>} : memref<1x128xf32, #tpu.memory_space<vmem>>, vector<1x128xf32>,
    } else {
    }
    return
  }
  func.func @transform_0(%arg0: i32, %arg1: i32) -> (i32, i32) {
    %c0_i32 = arith.constant 0 : i32
    %c0_i32_0 = arith.constant 0 : i32
    return %c0_i32, %arg0 : i32, i32
  }
  func.func @transform_1(%arg0: i32, %arg1: i32) -> (i32, i32) {
    %c0_i32 = arith.constant 0 : i32
    %c0_i32_0 = arith.constant 0 : i32
    return %arg1, %c0_i32 : i32, i32
  }
  func.func @transform_2(%arg0: i32, %arg1: i32) -> (i32, i32) {
    %c0_i32 = arith.constant 0 : i32
    %c0_i32_0 = arith.constant 0 : i32
    return %arg1, %c0_i32 : i32, i32
  }
  func.func @transform_3(%arg0: i32, %arg1: i32) -> (i32, i32) {
    %c0_i32 = arith.constant 0 : i32
    %c0_i32_0 = arith.constant 0 : i32
    return %c0_i32, %arg0 : i32, i32
  }
  func.func @transform_4(%arg0: i32, %arg1: i32) -> (i32, i32) {
    %c0_i32 = arith.constant 0 : i32
    %c0_i32_0 = arith.constant 0 : i32
    return %c0_i32, %arg0 : i32, i32
  }
}

</mosaic_0001>

<llo_original>
// kernel: tpu_custom_call.1
$region0: #{tpu_custom_call.1}
  #allocation0 [shape = 'u32[]', space=smem, size = 0x4, offset = 0x4, fixed_abs, tag = 'smem constant byte address 0x4 - core index']
  #allocation1 [shape = 'u32[72,128]{1,0:T(1,128)}', space=vmem, size = 0x9000, scoped, tag = 'internal scratch']
  #allocation2 [shape = 'f32[1,128]{1,0:T(1,128)}', space=vmem, size = 0x200, scoped, tag = 'scratch operand']
  #allocation3 [shape = 'f32[1,128]{1,0:T(1,128)}', space=vmem, size = 0x200, scoped, tag = 'scratch operand']
  %s0 = inlined_call_operand.vmem [shape: bf16[128,128], index: 0, kind: input, shape index: {}]
  %s1 = inlined_call_operand.vmem [shape: bf16[2048,128], index: 1, kind: input, shape index: {}]
  %s2 = inlined_call_operand.vmem [shape: f32[2048,1], index: 2, kind: input, shape index: {}]
  %s3 = inlined_call_operand.hbm [shape: f32[1,128], index: 3, kind: output, shape index: {0}]
  %s4 = inlined_call_operand.hbm [shape: f32[1,128], index: 4, kind: output, shape index: {1}]
  %5 = xla_tuple %s3, %s4
  %s6 = sld [smem:[#allocation0]]
  $region61: #{tpu_custom_call.1} parent=0
    _
  %s8 = ssub.s32 1, %s6
  %s9 = scalar_select 0, %s8, %s6
  $region1: #{tpu_custom_call.1} parent=0
    #allocation4 [shape = 'u8[512]{0}', space=vmem, size = 0x400, scoped, tag = 'output window, operand 0, single buffered']
    #allocation5 [shape = 's32[2]{0}', space=sflag, size = 0x8, scoped, tag = 'scoped memory for tpu_custom_call.1']
    #allocation6 [shape = 'u8[512]{0}', space=vmem, size = 0x400, scoped, tag = 'output window, operand 1, single buffered']
    #allocation7 [shape = 's32[1]{0}', space=sflag, size = 0x4, scoped, tag = 'scoped memory for tpu_custom_call.1']
    %10 = vsyncpa [#allocation5], 0
    %11 = vsyncpa [#allocation7], 0
    loop: start=0, step=1, limit=6
    $region2: #{tpu_custom_call.1} parent=1 // loop_pre_header
      _
    $region3: #{tpu_custom_call.1} parent=1 // loop_header
      %s13 = sphi 0, %s17
      %p14 = scmp.ge.s32.totalorder %s13, 6
      %s20 = sphi 0, %s32
      %s21 = sphi 0, %s28
      %s22 = sphi 0, %s20
      %s23 = sphi 0, %s21
      %s24 = sphi 0, %s22
      %s25 = sphi 0, %s23
      %s35 = sphi 0, %s37
      %s38 = sphi 0, %s35
      %s39 = sphi 0, %s38
      %s55 = sphi 0, %s39
      %s61 = sphi 0, %s63
      %s64 = sphi 0, %s61
      %s65 = sphi 0, %s64
      %s81 = sphi 0, %s65
      %s87 = sphi 0, %s89
      %s90 = sphi 0, %s87
      %s91 = sphi 0, %s90
      %s107 = sphi 0, %s91
      %s113 = sphi 0, %s115
      %s116 = sphi 0, %s113
      %s117 = sphi 0, %s116
      %s133 = sphi 0, %s117
      %s139 = sphi 0, %s141
      %s142 = sphi 0, %s139
      %s143 = sphi 0, %s142
      %s159 = sphi 0, %s143
    $region4: #{tpu_custom_call.1} parent=1 // loop_header_branch
      %16 = sbr.rel (%p14) target = $region8
    $region5: #{tpu_custom_call.1} parent=1 // loop_body
      %s18 = ssub.s32 %s13, 1
      %s19 = ssub.s32 %s13, 2
      %s26 = sadd.s32 1, %s21
      %p27 = scmp.ge.s32.totalorder %s26, 4
      %s28 = scalar_select %p27, 0, %s26
      %s29 = sadd.s32 1, %s20
      %s30 = scalar_select %p27, %s29, %s20
      %p31 = scmp.ge.s32.totalorder %s30, 1
      %s32 = scalar_select %p31, 0, %s30
      %s33 = ssub.s32 %s20, %s32
      %p34 = scmp.eq.s32.totalorder %s33, 0
      %s36 = sadd.s32 %s35, 1
      %s37 = scalar_select %p34, %s35, %s36
      %p40 = pneg %p34
      %p41 = scmp.eq.s32.totalorder %s13, 3
      %p42 = por %p40, %p41
      %p43 = scmp.ne.s32.totalorder %s35, %s38
      %p44 = scmp.eq.s32.totalorder %s13, 0
      %p45 = por %p43, %p44
      %p46 = scmp.ne.s32.totalorder %s35, %s38
      %p47 = scmp.eq.s32.totalorder %s18, 3
      %p48 = por %p46, %p47
      %p49 = scmp.ne.s32.totalorder %s38, %s39
      %p50 = scmp.eq.s32.totalorder %s18, 0
      %p51 = por %p49, %p50
      %p52 = scmp.ne.s32.totalorder %s38, %s39
      %p53 = scmp.eq.s32.totalorder %s19, 3
      %p54 = por %p52, %p53
      %p56 = scmp.ne.s32.totalorder %s39, %s55
      %p57 = scmp.eq.s32.totalorder %s19, 0
      %p58 = por %p56, %p57
      %s59 = ssub.s32 %s21, %s28
      %p60 = scmp.eq.s32.totalorder %s59, 0
      %s62 = sadd.s32 %s61, 1
      %s63 = scalar_select %p60, %s61, %s62
      %p66 = pneg %p60
      %p67 = scmp.eq.s32.totalorder %s13, 3
      %p68 = por %p66, %p67
      %p69 = scmp.ne.s32.totalorder %s61, %s64
      %p70 = scmp.eq.s32.totalorder %s13, 0
      %p71 = por %p69, %p70
      %p72 = scmp.ne.s32.totalorder %s61, %s64
      %p73 = scmp.eq.s32.totalorder %s18, 3
      %p74 = por %p72, %p73
      %p75 = scmp.ne.s32.totalorder %s64, %s65
      %p76 = scmp.eq.s32.totalorder %s18, 0
      %p77 = por %p75, %p76
      %p78 = scmp.ne.s32.totalorder %s64, %s65
      %p79 = scmp.eq.s32.totalorder %s19, 3
      %p80 = por %p78, %p79
      %p82 = scmp.ne.s32.totalorder %s65, %s81
      %p83 = scmp.eq.s32.totalorder %s19, 0
      %p84 = por %p82, %p83
      %s85 = ssub.s32 %s21, %s28
      %p86 = scmp.eq.s32.totalorder %s85, 0
      %s88 = sadd.s32 %s87, 1
      %s89 = scalar_select %p86, %s87, %s88
      %p92 = pneg %p86
      %p93 = scmp.eq.s32.totalorder %s13, 3
      %p94 = por %p92, %p93
      %p95 = scmp.ne.s32.totalorder %s87, %s90
      %p96 = scmp.eq.s32.totalorder %s13, 0
      %p97 = por %p95, %p96
      %p98 = scmp.ne.s32.totalorder %s87, %s90
      %p99 = scmp.eq.s32.totalorder %s18, 3
      %p100 = por %p98, %p99
      %p101 = scmp.ne.s32.totalorder %s90, %s91
      %p102 = scmp.eq.s32.totalorder %s18, 0
      %p103 = por %p101, %p102
      %p104 = scmp.ne.s32.totalorder %s90, %s91
      %p105 = scmp.eq.s32.totalorder %s19, 3
      %p106 = por %p104, %p105
      %p108 = scmp.ne.s32.totalorder %s91, %s107
      %p109 = scmp.eq.s32.totalorder %s19, 0
      %p110 = por %p108, %p109
      %s111 = ssub.s32 %s20, %s32
      %p112 = scmp.eq.s32.totalorder %s111, 0
      %s114 = sadd.s32 %s113, 1
      %s115 = scalar_select %p112, %s113, %s114
      %p118 = pneg %p112
      %p119 = scmp.eq.s32.totalorder %s13, 3
      %p120 = por %p118, %p119
      %p121 = scmp.ne.s32.totalorder %s113, %s116
      %p122 = scmp.eq.s32.totalorder %s13, 0
      %p123 = por %p121, %p122
      %p124 = scmp.ne.s32.totalorder %s113, %s116
      %p125 = scmp.eq.s32.totalorder %s18, 3
      %p126 = por %p124, %p125
      %p127 = scmp.ne.s32.totalorder %s116, %s117
      %p128 = scmp.eq.s32.totalorder %s18, 0
      %p129 = por %p127, %p128
      %p130 = scmp.ne.s32.totalorder %s116, %s117
      %p131 = scmp.eq.s32.totalorder %s19, 3
      %p132 = por %p130, %p131
      %p134 = scmp.ne.s32.totalorder %s117, %s133
      %p135 = scmp.eq.s32.totalorder %s19, 0
      %p136 = por %p134, %p135
      %s137 = ssub.s32 %s20, %s32
      %p138 = scmp.eq.s32.totalorder %s137, 0
      %s140 = sadd.s32 %s139, 1
      %s141 = scalar_select %p138, %s139, %s140
      %p144 = pneg %p138
      %p145 = scmp.eq.s32.totalorder %s13, 3
      %p146 = por %p144, %p145
      %p147 = scmp.ne.s32.totalorder %s139, %s142
      %p148 = scmp.eq.s32.totalorder %s13, 0
      %p149 = por %p147, %p148
      %p150 = scmp.ne.s32.totalorder %s139, %s142
      %p151 = scmp.eq.s32.totalorder %s18, 3
      %p152 = por %p150, %p151
      %p153 = scmp.ne.s32.totalorder %s142, %s143
      %p154 = scmp.eq.s32.totalorder %s18, 0
      %p155 = por %p153, %p154
      %p156 = scmp.ne.s32.totalorder %s142, %s143
      %p157 = scmp.eq.s32.totalorder %s19, 3
      %p158 = por %p156, %p157
      %p160 = scmp.ne.s32.totalorder %s143, %s159
      %p161 = scmp.eq.s32.totalorder %s19, 0
      %p162 = por %p160, %p161
      %p163 = scmp.le.s32.totalorder 1, %s13
      %p164 = scmp.lt.s32.totalorder %s13, 5
      %p165 = pnand %p163, %p164
      %p166 = pneg %p165
      // Predicated region
      $region9: #{tpu_custom_call.1} parent=5 // pred_check
        _
      $region10: #{tpu_custom_call.1} parent=5 // pred_check_branch
        %168 = sbr.rel (%p165) target = $region12
      $region11: #{tpu_custom_call.1} parent=5 // pred_region
        %s169 = ssub.s32 %s13, 1
        // Predicated region
        $region13: #{tpu_custom_call.1} parent=11 // pred_check
          %p170 = pneg %p51
        $region14: #{tpu_custom_call.1} parent=11 // pred_check_branch
          %172 = sbr.rel (%p170) target = $region16
        $region15: #{tpu_custom_call.1} parent=11 // pred_region
          %p173 = scmp.lt.s32.totalorder %s22, 0
          %s174 = scalar_select %p173, %s22, 0
          %s175 = smul.addr %s174, 4
          %s176 = scalar_lea.vmem %s0, %s175
        $region16: #{tpu_custom_call.1} parent=11 // pred_fallthru
          _
      $region12: #{tpu_custom_call.1} parent=5 // pred_fallthru
        _
      %p177 = scmp.lt.s32.totalorder %s13, 4
      // Predicated region
      $region17: #{tpu_custom_call.1} parent=5 // pred_check
        %p178 = pneg %p177
      $region18: #{tpu_custom_call.1} parent=5 // pred_check_branch
        %180 = sbr.rel (%p178) target = $region20
      $region19: #{tpu_custom_call.1} parent=5 // pred_region
        // Predicated region
        $region21: #{tpu_custom_call.1} parent=19 // pred_check
          %p181 = pneg %p71
        $region22: #{tpu_custom_call.1} parent=19 // pred_check_branch
          %183 = sbr.rel (%p181) target = $region24
        $region23: #{tpu_custom_call.1} parent=19 // pred_region
          %s184 = smul.u32 64, %s21
          %p185 = scmp.lt.s32.totalorder %s184, 255
          %s186 = scalar_select %p185, %s184, 255
          %s187 = smul.addr %s186, 4
          %s188 = scalar_lea.vmem %s1, %s187
          %s189 = smul.u32 64, %s21
        $region24: #{tpu_custom_call.1} parent=19 // pred_fallthru
          _
        // Predicated region
        $region25: #{tpu_custom_call.1} parent=19 // pred_check
          %p190 = pneg %p97
        $region26: #{tpu_custom_call.1} parent=19 // pred_check_branch
          %192 = sbr.rel (%p190) target = $region28
        $region27: #{tpu_custom_call.1} parent=19 // pred_region
          %s193 = smul.u32 64, %s21
          %p194 = scmp.lt.s32.totalorder %s193, 255
          %s195 = scalar_select %p194, %s193, 255
          %s196 = smul.addr %s195, 8
          %s197 = scalar_lea.vmem %s2, %s196
          %s198 = smul.u32 64, %s21
        $region28: #{tpu_custom_call.1} parent=19 // pred_fallthru
          _
      $region20: #{tpu_custom_call.1} parent=5 // pred_fallthru
        _
      %p199 = scmp.le.s32.totalorder 1, %s13
      %p200 = scmp.lt.s32.totalorder %s13, 5
      %p201 = pnand %p199, %p200
      %p202 = pneg %p201
      // Predicated region
      $region29: #{tpu_custom_call.1} parent=5 // pred_check
        _
      $region30: #{tpu_custom_call.1} parent=5 // pred_check_branch
        %204 = sbr.rel (%p201) target = $region32
      $region31: #{tpu_custom_call.1} parent=5 // pred_region
        %s205 = ssub.s32 %s13, 1
        %p206 = scmp.lt.s32.totalorder %s22, 0
        %s207 = scalar_select %p206, %s22, 0
        %s208 = smul.addr %s207, 4
        %s209 = scalar_lea.vmem %s0, %s208
        %p210 = pneg %p51
        %p211 = pneg %p48
        %s212 = smul.u32 64, %s23
        %p213 = scmp.lt.s32.totalorder %s212, 255
        %s214 = scalar_select %p213, %s212, 255
        %s215 = smul.addr %s214, 4
        %s216 = scalar_lea.vmem %s1, %s215
        %p217 = pneg %p77
        %p218 = pneg %p74
        %s219 = smul.u32 64, %s23
        %p220 = scmp.lt.s32.totalorder %s219, 255
        %s221 = scalar_select %p220, %s219, 255
        %s222 = smul.addr %s221, 8
        %s223 = scalar_lea.vmem %s2, %s222
        %p224 = pneg %p103
        %p225 = pneg %p100
        %p226 = pneg %p129
        %p227 = pneg %p126
        %p228 = pneg %p155
        %p229 = pneg %p152
        %p230 = scmp.lt.s32.totalorder %s22, 0
        %s231 = scalar_select %p230, %s22, 0
        %s232 = smul.addr %s231, 4
        %s233 = scalar_lea.vmem %s0, %s232
        %s234 = smul.u32 64, %s23
        %p235 = scmp.lt.s32.totalorder %s234, 255
        %s236 = scalar_select %p235, %s234, 255
        %s237 = smul.addr %s236, 4
        %s238 = scalar_lea.vmem %s1, %s237
        %s239 = smul.u32 64, %s23
        %s240 = smul.u32 64, %s23
        %p241 = scmp.lt.s32.totalorder %s240, 255
        %s242 = scalar_select %p241, %s240, 255
        %s243 = smul.addr %s242, 8
        %s244 = scalar_lea.vmem %s2, %s243
        %s245 = smul.u32 64, %s23
        %p246 = scmp.eq.s32.totalorder %s23, 0
        // Predicated region
        $region33: #{tpu_custom_call.1} parent=31 // pred_check
          %p247 = pneg %p246
        $region34: #{tpu_custom_call.1} parent=31 // pred_check_branch
          %249 = sbr.rel (%p247) target = $region36
        $region35: #{tpu_custom_call.1} parent=31 // pred_region
          %250 = vst [vmem:[#allocation2] sm:$0x1] -1e+30
          %251 = vst [vmem:[#allocation3] sm:$0x1] 0.0
          %252 = vst [vmem:[#allocation6] sm:$0x1] 0.0
        $region36: #{tpu_custom_call.1} parent=31 // pred_fallthru
          _
        %v253 = vld [vmem:[%s238] sm:$0xf]
        %v254 = vld [vmem:[%s238 + $0x4] sm:$0xf]
        %v255 = vld [vmem:[%s238 + $0x8] sm:$0xf]
        %v256 = vld [vmem:[%s238 + $0xc] sm:$0xf]
        %v257 = vld [vmem:[%s238 + $0x10] sm:$0xf]
        %v258 = vld [vmem:[%s238 + $0x14] sm:$0xf]
        %v259 = vld [vmem:[%s238 + $0x18] sm:$0xf]
        %v260 = vld [vmem:[%s238 + $0x1c] sm:$0xf]
        %v261 = vld [vmem:[%s238 + $0x20] sm:$0xf]
        %v262 = vld [vmem:[%s238 + $0x24] sm:$0xf]
        %v263 = vld [vmem:[%s238 + $0x28] sm:$0xf]
        %v264 = vld [vmem:[%s238 + $0x2c] sm:$0xf]
        %v265 = vld [vmem:[%s238 + $0x30] sm:$0xf]
        %v266 = vld [vmem:[%s238 + $0x34] sm:$0xf]
        %v267 = vld [vmem:[%s238 + $0x38] sm:$0xf]
        %v268 = vld [vmem:[%s238 + $0x3c] sm:$0xf]
        %v269 = vld [vmem:[%s238 + $0x40] sm:$0xf]
        %v270 = vld [vmem:[%s238 + $0x44] sm:$0xf]
        %v271 = vld [vmem:[%s238 + $0x48] sm:$0xf]
        %v272 = vld [vmem:[%s238 + $0x4c] sm:$0xf]
        %v273 = vld [vmem:[%s238 + $0x50] sm:$0xf]
        %v274 = vld [vmem:[%s238 + $0x54] sm:$0xf]
        %v275 = vld [vmem:[%s238 + $0x58] sm:$0xf]
        %v276 = vld [vmem:[%s238 + $0x5c] sm:$0xf]
        %v277 = vld [vmem:[%s238 + $0x60] sm:$0xf]
        %v278 = vld [vmem:[%s238 + $0x64] sm:$0xf]
        %v279 = vld [vmem:[%s238 + $0x68] sm:$0xf]
        %v280 = vld [vmem:[%s238 + $0x6c] sm:$0xf]
        %v281 = vld [vmem:[%s238 + $0x70] sm:$0xf]
        %v282 = vld [vmem:[%s238 + $0x74] sm:$0xf]
        %v283 = vld [vmem:[%s238 + $0x78] sm:$0xf]
        %v284 = vld [vmem:[%s238 + $0x7c] sm:$0xf]
        %v285 = vld [vmem:[%s238 + $0x80] sm:$0xf]
        %v286 = vld [vmem:[%s238 + $0x84] sm:$0xf]
        %v287 = vld [vmem:[%s238 + $0x88] sm:$0xf]
        %v288 = vld [vmem:[%s238 + $0x8c] sm:$0xf]
        %v289 = vld [vmem:[%s238 + $0x90] sm:$0xf]
        %v290 = vld [vmem:[%s238 + $0x94] sm:$0xf]
        %v291 = vld [vmem:[%s238 + $0x98] sm:$0xf]
        %v292 = vld [vmem:[%s238 + $0x9c] sm:$0xf]
        %v293 = vld [vmem:[%s238 + $0xa0] sm:$0xf]
        %v294 = vld [vmem:[%s238 + $0xa4] sm:$0xf]
        %v295 = vld [vmem:[%s238 + $0xa8] sm:$0xf]
        %v296 = vld [vmem:[%s238 + $0xac] sm:$0xf]
        %v297 = vld [vmem:[%s238 + $0xb0] sm:$0xf]
        %v298 = vld [vmem:[%s238 + $0xb4] sm:$0xf]
        %v299 = vld [vmem:[%s238 + $0xb8] sm:$0xf]
        %v300 = vld [vmem:[%s238 + $0xbc] sm:$0xf]
        %v301 = vld [vmem:[%s238 + $0xc0] sm:$0xf]
        %v302 = vld [vmem:[%s238 + $0xc4] sm:$0xf]
        %v303 = vld [vmem:[%s238 + $0xc8] sm:$0xf]
        %v304 = vld [vmem:[%s238 + $0xcc] sm:$0xf]
        %v305 = vld [vmem:[%s238 + $0xd0] sm:$0xf]
        %v306 = vld [vmem:[%s238 + $0xd4] sm:$0xf]
        %v307 = vld [vmem:[%s238 + $0xd8] sm:$0xf]
        %v308 = vld [vmem:[%s238 + $0xdc] sm:$0xf]
        %v309 = vld [vmem:[%s238 + $0xe0] sm:$0xf]
        %v310 = vld [vmem:[%s238 + $0xe4] sm:$0xf]
        %v311 = vld [vmem:[%s238 + $0xe8] sm:$0xf]
        %v312 = vld [vmem:[%s238 + $0xec] sm:$0xf]
        %v313 = vld [vmem:[%s238 + $0xf0] sm:$0xf]
        %v314 = vld [vmem:[%s238 + $0xf4] sm:$0xf]
        %v315 = vld [vmem:[%s238 + $0xf8] sm:$0xf]
        %v316 = vld [vmem:[%s238 + $0xfc] sm:$0xf]
        %v317 = vld [vmem:[%s233] sm:$0xf]
        %v318 = vld [vmem:[%s233 + $0x4] sm:$0xf]
        %v319 = vld [vmem:[%s233 + $0x8] sm:$0xf]
        %v320 = vld [vmem:[%s233 + $0xc] sm:$0xf]
        %v321 = vld [vmem:[%s233 + $0x10] sm:$0xf]
        %v322 = vld [vmem:[%s233 + $0x14] sm:$0xf]
        %v323 = vld [vmem:[%s233 + $0x18] sm:$0xf]
        %v324 = vld [vmem:[%s233 + $0x1c] sm:$0xf]
        %v325 = vld [vmem:[%s233 + $0x20] sm:$0xf]
        %v326 = vld [vmem:[%s233 + $0x24] sm:$0xf]
        %v327 = vld [vmem:[%s233 + $0x28] sm:$0xf]
        %v328 = vld [vmem:[%s233 + $0x2c] sm:$0xf]
        %v329 = vld [vmem:[%s233 + $0x30] sm:$0xf]
        %v330 = vld [vmem:[%s233 + $0x34] sm:$0xf]
        %v331 = vld [vmem:[%s233 + $0x38] sm:$0xf]
        %v332 = vld [vmem:[%s233 + $0x3c] sm:$0xf]
        %v333 = vld [vmem:[%s244] sm:$0xff]
        %v334 = vld [vmem:[%s244 + $0x8] sm:$0xff]
        %v335 = vld [vmem:[%s244 + $0x10] sm:$0xff]
        %v336 = vld [vmem:[%s244 + $0x18] sm:$0xff]
        %v337 = vld [vmem:[%s244 + $0x20] sm:$0xff]
        %v338 = vld [vmem:[%s244 + $0x28] sm:$0xff]
        %v339 = vld [vmem:[%s244 + $0x30] sm:$0xff]
        %v340 = vld [vmem:[%s244 + $0x38] sm:$0xff]
        %v341 = vld [vmem:[%s244 + $0x40] sm:$0xff]
        %v342 = vld [vmem:[%s244 + $0x48] sm:$0xff]
        %v343 = vld [vmem:[%s244 + $0x50] sm:$0xff]
        %v344 = vld [vmem:[%s244 + $0x58] sm:$0xff]
        %v345 = vld [vmem:[%s244 + $0x60] sm:$0xff]
        %v346 = vld [vmem:[%s244 + $0x68] sm:$0xff]
        %v347 = vld [vmem:[%s244 + $0x70] sm:$0xff]
        %v348 = vld [vmem:[%s244 + $0x78] sm:$0xff]
        %v349 = vld [vmem:[%s244 + $0x80] sm:$0xff]
        %v350 = vld [vmem:[%s244 + $0x88] sm:$0xff]
        %v351 = vld [vmem:[%s244 + $0x90] sm:$0xff]
        %v352 = vld [vmem:[%s244 + $0x98] sm:$0xff]
        %v353 = vld [vmem:[%s244 + $0xa0] sm:$0xff]
        %v354 = vld [vmem:[%s244 + $0xa8] sm:$0xff]
        %v355 = vld [vmem:[%s244 + $0xb0] sm:$0xff]
        %v356 = vld [vmem:[%s244 + $0xb8] sm:$0xff]
        %v357 = vld [vmem:[%s244 + $0xc0] sm:$0xff]
        %v358 = vld [vmem:[%s244 + $0xc8] sm:$0xff]
        %v359 = vld [vmem:[%s244 + $0xd0] sm:$0xff]
        %v360 = vld [vmem:[%s244 + $0xd8] sm:$0xff]
        %v361 = vld [vmem:[%s244 + $0xe0] sm:$0xff]
        %v362 = vld [vmem:[%s244 + $0xe8] sm:$0xff]
        %v363 = vld [vmem:[%s244 + $0xf0] sm:$0xff]
        %v364 = vld [vmem:[%s244 + $0xf8] sm:$0xff]
        %v365 = vld [vmem:[%s244 + $0x100] sm:$0xff]
        %v366 = vld [vmem:[%s244 + $0x108] sm:$0xff]
        %v367 = vld [vmem:[%s244 + $0x110] sm:$0xff]
        %v368 = vld [vmem:[%s244 + $0x118] sm:$0xff]
        %v369 = vld [vmem:[%s244 + $0x120] sm:$0xff]
        %v370 = vld [vmem:[%s244 + $0x128] sm:$0xff]
        %v371 = vld [vmem:[%s244 + $0x130] sm:$0xff]
        %v372 = vld [vmem:[%s244 + $0x138] sm:$0xff]
        %v373 = vld [vmem:[%s244 + $0x140] sm:$0xff]
        %v374 = vld [vmem:[%s244 + $0x148] sm:$0xff]
        %v375 = vld [vmem:[%s244 + $0x150] sm:$0xff]
        %v376 = vld [vmem:[%s244 + $0x158] sm:$0xff]
        %v377 = vld [vmem:[%s244 + $0x160] sm:$0xff]
        %v378 = vld [vmem:[%s244 + $0x168] sm:$0xff]
        %v379 = vld [vmem:[%s244 + $0x170] sm:$0xff]
        %v380 = vld [vmem:[%s244 + $0x178] sm:$0xff]
        %v381 = vld [vmem:[%s244 + $0x180] sm:$0xff]
        %v382 = vld [vmem:[%s244 + $0x188] sm:$0xff]
        %v383 = vld [vmem:[%s244 + $0x190] sm:$0xff]
        %v384 = vld [vmem:[%s244 + $0x198] sm:$0xff]
        %v385 = vld [vmem:[%s244 + $0x1a0] sm:$0xff]
        %v386 = vld [vmem:[%s244 + $0x1a8] sm:$0xff]
        %v387 = vld [vmem:[%s244 + $0x1b0] sm:$0xff]
        %v388 = vld [vmem:[%s244 + $0x1b8] sm:$0xff]
        %v389 = vld [vmem:[%s244 + $0x1c0] sm:$0xff]
        %v390 = vld [vmem:[%s244 + $0x1c8] sm:$0xff]
        %v391 = vld [vmem:[%s244 + $0x1d0] sm:$0xff]
        %v392 = vld [vmem:[%s244 + $0x1d8] sm:$0xff]
        %v393 = vld [vmem:[%s244 + $0x1e0] sm:$0xff]
        %v394 = vld [vmem:[%s244 + $0x1e8] sm:$0xff]
        %v395 = vld [vmem:[%s244 + $0x1f0] sm:$0xff]
        %v396 = vld [vmem:[%s244 + $0x1f8] sm:$0xff]
        %398 = vset.pattern.permute.xlu0 0
        %399 = vperm.xlu0 %398, %v333
        %v400 = vpop.permute.xlu0 %399
        %403 = vset.pattern.permute.xlu0 0
        %404 = vperm.xlu0 %403, %v334
        %v405 = vpop.permute.xlu0 %404
        %408 = vset.pattern.permute.xlu0 0
        %409 = vperm.xlu0 %408, %v335
        %v410 = vpop.permute.xlu0 %409
        %413 = vset.pattern.permute.xlu0 0
        %414 = vperm.xlu0 %413, %v336
        %v415 = vpop.permute.xlu0 %414
        %418 = vset.pattern.permute.xlu0 0
        %419 = vperm.xlu0 %418, %v337
        %v420 = vpop.permute.xlu0 %419
        %423 = vset.pattern.permute.xlu0 0
        %424 = vperm.xlu0 %423, %v338
        %v425 = vpop.permute.xlu0 %424
        %428 = vset.pattern.permute.xlu0 0
        %429 = vperm.xlu0 %428, %v339
        %v430 = vpop.permute.xlu0 %429
        %433 = vset.pattern.permute.xlu0 0
        %434 = vperm.xlu0 %433, %v340
        %v435 = vpop.permute.xlu0 %434
        %438 = vset.pattern.permute.xlu0 0
        %439 = vperm.xlu0 %438, %v341
        %v440 = vpop.permute.xlu0 %439
        %443 = vset.pattern.permute.xlu0 0
        %444 = vperm.xlu0 %443, %v342
        %v445 = vpop.permute.xlu0 %444
        %448 = vset.pattern.permute.xlu0 0
        %449 = vperm.xlu0 %448, %v343
        %v450 = vpop.permute.xlu0 %449
        %453 = vset.pattern.permute.xlu0 0
        %454 = vperm.xlu0 %453, %v344
        %v455 = vpop.permute.xlu0 %454
        %458 = vset.pattern.permute.xlu0 0
        %459 = vperm.xlu0 %458, %v345
        %v460 = vpop.permute.xlu0 %459
        %463 = vset.pattern.permute.xlu0 0
        %464 = vperm.xlu0 %463, %v346
        %v465 = vpop.permute.xlu0 %464
        %468 = vset.pattern.permute.xlu0 0
        %469 = vperm.xlu0 %468, %v347
        %v470 = vpop.permute.xlu0 %469
        %473 = vset.pattern.permute.xlu0 0
        %474 = vperm.xlu0 %473, %v348
        %v475 = vpop.permute.xlu0 %474
        %478 = vset.pattern.permute.xlu0 0
        %479 = vperm.xlu0 %478, %v349
        %v480 = vpop.permute.xlu0 %479
        %483 = vset.pattern.permute.xlu0 0
        %484 = vperm.xlu0 %483, %v350
        %v485 = vpop.permute.xlu0 %484
        %488 = vset.pattern.permute.xlu0 0
        %489 = vperm.xlu0 %488, %v351
        %v490 = vpop.permute.xlu0 %489
        %493 = vset.pattern.permute.xlu0 0
        %494 = vperm.xlu0 %493, %v352
        %v495 = vpop.permute.xlu0 %494
        %498 = vset.pattern.permute.xlu0 0
        %499 = vperm.xlu0 %498, %v353
        %v500 = vpop.permute.xlu0 %499
        %503 = vset.pattern.permute.xlu0 0
        %504 = vperm.xlu0 %503, %v354
        %v505 = vpop.permute.xlu0 %504
        %508 = vset.pattern.permute.xlu0 0
        %509 = vperm.xlu0 %508, %v355
        %v510 = vpop.permute.xlu0 %509
        %513 = vset.pattern.permute.xlu0 0
        %514 = vperm.xlu0 %513, %v356
        %v515 = vpop.permute.xlu0 %514
        %518 = vset.pattern.permute.xlu0 0
        %519 = vperm.xlu0 %518, %v357
        %v520 = vpop.permute.xlu0 %519
        %523 = vset.pattern.permute.xlu0 0
        %524 = vperm.xlu0 %523, %v358
        %v525 = vpop.permute.xlu0 %524
        %528 = vset.pattern.permute.xlu0 0
        %529 = vperm.xlu0 %528, %v359
        %v530 = vpop.permute.xlu0 %529
        %533 = vset.pattern.permute.xlu0 0
        %534 = vperm.xlu0 %533, %v360
        %v535 = vpop.permute.xlu0 %534
        %538 = vset.pattern.permute.xlu0 0
        %539 = vperm.xlu0 %538, %v361
        %v540 = vpop.permute.xlu0 %539
        %543 = vset.pattern.permute.xlu0 0
        %544 = vperm.xlu0 %543, %v362
        %v545 = vpop.permute.xlu0 %544
        %548 = vset.pattern.permute.xlu0 0
        %549 = vperm.xlu0 %548, %v363
        %v550 = vpop.permute.xlu0 %549
        %553 = vset.pattern.permute.xlu0 0
        %554 = vperm.xlu0 %553, %v364
        %v555 = vpop.permute.xlu0 %554
        %558 = vset.pattern.permute.xlu0 0
        %559 = vperm.xlu0 %558, %v365
        %v560 = vpop.permute.xlu0 %559
        %563 = vset.pattern.permute.xlu0 0
        %564 = vperm.xlu0 %563, %v366
        %v565 = vpop.permute.xlu0 %564
        %568 = vset.pattern.permute.xlu0 0
        %569 = vperm.xlu0 %568, %v367
        %v570 = vpop.permute.xlu0 %569
        %573 = vset.pattern.permute.xlu0 0
        %574 = vperm.xlu0 %573, %v368
        %v575 = vpop.permute.xlu0 %574
        %578 = vset.pattern.permute.xlu0 0
        %579 = vperm.xlu0 %578, %v369
        %v580 = vpop.permute.xlu0 %579
        %583 = vset.pattern.permute.xlu0 0
        %584 = vperm.xlu0 %583, %v370
        %v585 = vpop.permute.xlu0 %584
        %588 = vset.pattern.permute.xlu0 0
        %589 = vperm.xlu0 %588, %v371
        %v590 = vpop.permute.xlu0 %589
        %593 = vset.pattern.permute.xlu0 0
        %594 = vperm.xlu0 %593, %v372
        %v595 = vpop.permute.xlu0 %594
        %598 = vset.pattern.permute.xlu0 0
        %599 = vperm.xlu0 %598, %v373
        %v600 = vpop.permute.xlu0 %599
        %603 = vset.pattern.permute.xlu0 0
        %604 = vperm.xlu0 %603, %v374
        %v605 = vpop.permute.xlu0 %604
        %608 = vset.pattern.permute.xlu0 0
        %609 = vperm.xlu0 %608, %v375
        %v610 = vpop.permute.xlu0 %609
        %613 = vset.pattern.permute.xlu0 0
        %614 = vperm.xlu0 %613, %v376
        %v615 = vpop.permute.xlu0 %614
        %618 = vset.pattern.permute.xlu0 0
        %619 = vperm.xlu0 %618, %v377
        %v620 = vpop.permute.xlu0 %619
        %623 = vset.pattern.permute.xlu0 0
        %624 = vperm.xlu0 %623, %v378
        %v625 = vpop.permute.xlu0 %624
        %628 = vset.pattern.permute.xlu0 0
        %629 = vperm.xlu0 %628, %v379
        %v630 = vpop.permute.xlu0 %629
        %633 = vset.pattern.permute.xlu0 0
        %634 = vperm.xlu0 %633, %v380
        %v635 = vpop.permute.xlu0 %634
        %638 = vset.pattern.permute.xlu0 0
        %639 = vperm.xlu0 %638, %v381
        %v640 = vpop.permute.xlu0 %639
        %643 = vset.pattern.permute.xlu0 0
        %644 = vperm.xlu0 %643, %v382
        %v645 = vpop.permute.xlu0 %644
        %648 = vset.pattern.permute.xlu0 0
        %649 = vperm.xlu0 %648, %v383
        %v650 = vpop.permute.xlu0 %649
        %653 = vset.pattern.permute.xlu0 0
        %654 = vperm.xlu0 %653, %v384
        %v655 = vpop.permute.xlu0 %654
        %658 = vset.pattern.permute.xlu0 0
        %659 = vperm.xlu0 %658, %v385
        %v660 = vpop.permute.xlu0 %659
        %663 = vset.pattern.permute.xlu0 0
        %664 = vperm.xlu0 %663, %v386
        %v665 = vpop.permute.xlu0 %664
        %668 = vset.pattern.permute.xlu0 0
        %669 = vperm.xlu0 %668, %v387
        %v670 = vpop.permute.xlu0 %669
        %673 = vset.pattern.permute.xlu0 0
        %674 = vperm.xlu0 %673, %v388
        %v675 = vpop.permute.xlu0 %674
        %678 = vset.pattern.permute.xlu0 0
        %679 = vperm.xlu0 %678, %v389
        %v680 = vpop.permute.xlu0 %679
        %683 = vset.pattern.permute.xlu0 0
        %684 = vperm.xlu0 %683, %v390
        %v685 = vpop.permute.xlu0 %684
        %688 = vset.pattern.permute.xlu0 0
        %689 = vperm.xlu0 %688, %v391
        %v690 = vpop.permute.xlu0 %689
        %693 = vset.pattern.permute.xlu0 0
        %694 = vperm.xlu0 %693, %v392
        %v695 = vpop.permute.xlu0 %694
        %698 = vset.pattern.permute.xlu0 0
        %699 = vperm.xlu0 %698, %v393
        %v700 = vpop.permute.xlu0 %699
        %703 = vset.pattern.permute.xlu0 0
        %704 = vperm.xlu0 %703, %v394
        %v705 = vpop.permute.xlu0 %704
        %708 = vset.pattern.permute.xlu0 0
        %709 = vperm.xlu0 %708, %v395
        %v710 = vpop.permute.xlu0 %709
        %713 = vset.pattern.permute.xlu0 0
        %714 = vperm.xlu0 %713, %v396
        %v715 = vpop.permute.xlu0 %714
        %v781 = vunpack.c.l.b16 %v253
        %v782 = vunpack.c.l.b16 %v254
        %v783 = vunpack.c.l.b16 %v255
        %v784 = vunpack.c.l.b16 %v256
        %v785 = vunpack.c.l.b16 %v257
        %v786 = vunpack.c.l.b16 %v258
        %v787 = vunpack.c.l.b16 %v259
        %v788 = vunpack.c.l.b16 %v260
        %v789 = vunpack.c.l.b16 %v261
        %v790 = vunpack.c.l.b16 %v262
        %v791 = vunpack.c.l.b16 %v263
        %v792 = vunpack.c.l.b16 %v264
        %v793 = vunpack.c.l.b16 %v265
        %v794 = vunpack.c.l.b16 %v266
        %v795 = vunpack.c.l.b16 %v267
        %v796 = vunpack.c.l.b16 %v268
        %v797 = vunpack.c.l.b16 %v269
        %v798 = vunpack.c.l.b16 %v270
        %v799 = vunpack.c.l.b16 %v271
        %v800 = vunpack.c.l.b16 %v272
        %v801 = vunpack.c.l.b16 %v273
        %v802 = vunpack.c.l.b16 %v274
        %v803 = vunpack.c.l.b16 %v275
        %v804 = vunpack.c.l.b16 %v276
        %v805 = vunpack.c.l.b16 %v277
        %v806 = vunpack.c.l.b16 %v278
        %v807 = vunpack.c.l.b16 %v279
        %v808 = vunpack.c.l.b16 %v280
        %v809 = vunpack.c.l.b16 %v281
        %v810 = vunpack.c.l.b16 %v282
        %v811 = vunpack.c.l.b16 %v283
        %v812 = vunpack.c.l.b16 %v284
        %v813 = vunpack.c.l.b16 %v285
        %v814 = vunpack.c.l.b16 %v286
        %v815 = vunpack.c.l.b16 %v287
        %v816 = vunpack.c.l.b16 %v288
        %v817 = vunpack.c.l.b16 %v289
        %v818 = vunpack.c.l.b16 %v290
        %v819 = vunpack.c.l.b16 %v291
        %v820 = vunpack.c.l.b16 %v292
        %v821 = vunpack.c.l.b16 %v293
        %v822 = vunpack.c.l.b16 %v294
        %v823 = vunpack.c.l.b16 %v295
        %v824 = vunpack.c.l.b16 %v296
        %v825 = vunpack.c.l.b16 %v297
        %v826 = vunpack.c.l.b16 %v298
        %v827 = vunpack.c.l.b16 %v299
        %v828 = vunpack.c.l.b16 %v300
        %v829 = vunpack.c.l.b16 %v301
        %v830 = vunpack.c.l.b16 %v302
        %v831 = vunpack.c.l.b16 %v303
        %v832 = vunpack.c.l.b16 %v304
        %v833 = vunpack.c.l.b16 %v305
        %v834 = vunpack.c.l.b16 %v306
        %v835 = vunpack.c.l.b16 %v307
        %v836 = vunpack.c.l.b16 %v308
        %v837 = vunpack.c.l.b16 %v309
        %v838 = vunpack.c.l.b16 %v310
        %v839 = vunpack.c.l.b16 %v311
        %v840 = vunpack.c.l.b16 %v312
        %v841 = vunpack.c.l.b16 %v313
        %v842 = vunpack.c.l.b16 %v314
        %v843 = vunpack.c.l.b16 %v315
        %v844 = vunpack.c.l.b16 %v316
        %v845 = vpack.c.b16 %v782, %v781
        %v846 = vpack.c.b16 %v784, %v783
        %v847 = vpack.c.b16 %v786, %v785
        %v848 = vpack.c.b16 %v788, %v787
        %v849 = vpack.c.b16 %v790, %v789
        %v850 = vpack.c.b16 %v792, %v791
        %v851 = vpack.c.b16 %v794, %v793
        %v852 = vpack.c.b16 %v796, %v795
        %v853 = vpack.c.b16 %v798, %v797
        %v854 = vpack.c.b16 %v800, %v799
        %v855 = vpack.c.b16 %v802, %v801
        %v856 = vpack.c.b16 %v804, %v803
        %v857 = vpack.c.b16 %v806, %v805
        %v858 = vpack.c.b16 %v808, %v807
        %v859 = vpack.c.b16 %v810, %v809
        %v860 = vpack.c.b16 %v812, %v811
        %v861 = vpack.c.b16 %v814, %v813
        %v862 = vpack.c.b16 %v816, %v815
        %v863 = vpack.c.b16 %v818, %v817
        %v864 = vpack.c.b16 %v820, %v819
        %v865 = vpack.c.b16 %v822, %v821
        %v866 = vpack.c.b16 %v824, %v823
        %v867 = vpack.c.b16 %v826, %v825
        %v868 = vpack.c.b16 %v828, %v827
        %v869 = vpack.c.b16 %v830, %v829
        %v870 = vpack.c.b16 %v832, %v831
        %v871 = vpack.c.b16 %v834, %v833
        %v872 = vpack.c.b16 %v836, %v835
        %v873 = vpack.c.b16 %v838, %v837
        %v874 = vpack.c.b16 %v840, %v839
        %v875 = vpack.c.b16 %v842, %v841
        %v876 = vpack.c.b16 %v844, %v843
        %v925 = vunpack.c.l.b16 %v317
        %v926 = vunpack.c.l.b16 %v318
        %v927 = vunpack.c.l.b16 %v319
        %v928 = vunpack.c.l.b16 %v320
        %v929 = vunpack.c.l.b16 %v321
        %v930 = vunpack.c.l.b16 %v322
        %v931 = vunpack.c.l.b16 %v323
        %v932 = vunpack.c.l.b16 %v324
        %v933 = vunpack.c.l.b16 %v325
        %v934 = vunpack.c.l.b16 %v326
        %v935 = vunpack.c.l.b16 %v327
        %v936 = vunpack.c.l.b16 %v328
        %v937 = vunpack.c.l.b16 %v329
        %v938 = vunpack.c.l.b16 %v330
        %v939 = vunpack.c.l.b16 %v331
        %v940 = vunpack.c.l.b16 %v332
        %v941 = vpack.c.b16 %v926, %v925
        %v942 = vpack.c.b16 %v928, %v927
        %v943 = vpack.c.b16 %v930, %v929
        %v944 = vpack.c.b16 %v932, %v931
        %v945 = vpack.c.b16 %v934, %v933
        %v946 = vpack.c.b16 %v936, %v935
        %v947 = vpack.c.b16 %v938, %v937
        %v948 = vpack.c.b16 %v940, %v939
        %957 = vmatpush.bf16.msra.mxu0 %v948
        %958 = vmatpush.bf16.msra.mxu0 %v947
        %959 = vmatpush.bf16.msra.mxu0 %v946
        %960 = vmatpush.bf16.msra.mxu0 %v945
        %961 = vmatpush.bf16.msra.mxu0 %v944
        %962 = vmatpush.bf16.msra.mxu0 %v943
        %963 = vmatpush.bf16.msra.mxu0 %v942
        %964 = vmatpush.bf16.msra.mxu0 %v941
        %965 = vmatmul.bf16.gmra.mxu0 %v845
        %v966 = vpop.f32.mrf.mxu0
        %v967 = vadd.f32 %v400, %v966
        %v968 = vpop.f32.mrf.mxu0
        %v969 = vadd.f32 %v405, %v968
        %970 = vmatmul.bf16.gmra.mxu0 %v846
        %v971 = vpop.f32.mrf.mxu0
        %v972 = vadd.f32 %v410, %v971
        %v973 = vpop.f32.mrf.mxu0
        %v974 = vadd.f32 %v415, %v973
        %975 = vmatmul.bf16.gmra.mxu0 %v847
        %v976 = vpop.f32.mrf.mxu0
        %v977 = vadd.f32 %v420, %v976
        %v978 = vpop.f32.mrf.mxu0
        %v979 = vadd.f32 %v425, %v978
        %980 = vmatmul.bf16.gmra.mxu0 %v848
        %v981 = vpop.f32.mrf.mxu0
        %v982 = vadd.f32 %v430, %v981
        %v983 = vpop.f32.mrf.mxu0
        %v984 = vadd.f32 %v435, %v983
        %985 = vmatmul.bf16.gmra.mxu0 %v849
        %v986 = vpop.f32.mrf.mxu0
        %v987 = vadd.f32 %v440, %v986
        %v988 = vpop.f32.mrf.mxu0
        %v989 = vadd.f32 %v445, %v988
        %990 = vmatmul.bf16.gmra.mxu0 %v850
        %v991 = vpop.f32.mrf.mxu0
        %v992 = vadd.f32 %v450, %v991
        %v993 = vpop.f32.mrf.mxu0
        %v994 = vadd.f32 %v455, %v993
        %995 = vmatmul.bf16.gmra.mxu0 %v851
        %v996 = vpop.f32.mrf.mxu0
        %v997 = vadd.f32 %v460, %v996
        %v998 = vpop.f32.mrf.mxu0
        %v999 = vadd.f32 %v465, %v998
        %1000 = vmatmul.bf16.gmra.mxu0 %v852
        %v1001 = vpop.f32.mrf.mxu0
        %v1002 = vadd.f32 %v470, %v1001
        %v1003 = vpop.f32.mrf.mxu0
        %v1004 = vadd.f32 %v475, %v1003
        %1005 = vmatmul.bf16.gmra.mxu0 %v853
        %v1006 = vpop.f32.mrf.mxu0
        %v1007 = vadd.f32 %v480, %v1006
        %v1008 = vpop.f32.mrf.mxu0
        %v1009 = vadd.f32 %v485, %v1008
        %1010 = vmatmul.bf16.gmra.mxu0 %v854
        %v1011 = vpop.f32.mrf.mxu0
        %v1012 = vadd.f32 %v490, %v1011
        %v1013 = vpop.f32.mrf.mxu0
        %v1014 = vadd.f32 %v495, %v1013
        %1015 = vmatmul.bf16.gmra.mxu0 %v855
        %v1016 = vpop.f32.mrf.mxu0
        %v1017 = vadd.f32 %v500, %v1016
        %v1018 = vpop.f32.mrf.mxu0
        %v1019 = vadd.f32 %v505, %v1018
        %1020 = vmatmul.bf16.gmra.mxu0 %v856
        %v1021 = vpop.f32.mrf.mxu0
        %v1022 = vadd.f32 %v510, %v1021
        %v1023 = vpop.f32.mrf.mxu0
        %v1024 = vadd.f32 %v515, %v1023
        %1025 = vmatmul.bf16.gmra.mxu0 %v857
        %v1026 = vpop.f32.mrf.mxu0
        %v1027 = vadd.f32 %v520, %v1026
        %v1028 = vpop.f32.mrf.mxu0
        %v1029 = vadd.f32 %v525, %v1028
        %1030 = vmatmul.bf16.gmra.mxu0 %v858
        %v1031 = vpop.f32.mrf.mxu0
        %v1032 = vadd.f32 %v530, %v1031
        %v1033 = vpop.f32.mrf.mxu0
        %v1034 = vadd.f32 %v535, %v1033
        %1035 = vmatmul.bf16.gmra.mxu0 %v859
        %v1036 = vpop.f32.mrf.mxu0
        %v1037 = vadd.f32 %v540, %v1036
        %v1038 = vpop.f32.mrf.mxu0
        %v1039 = vadd.f32 %v545, %v1038
        %1040 = vmatmul.bf16.gmra.mxu0 %v860
        %v1041 = vpop.f32.mrf.mxu0
        %v1042 = vadd.f32 %v550, %v1041
        %v1043 = vpop.f32.mrf.mxu0
        %v1044 = vadd.f32 %v555, %v1043
        %1045 = vmatmul.bf16.gmra.mxu0 %v861
        %v1046 = vpop.f32.mrf.mxu0
        %v1047 = vadd.f32 %v560, %v1046
        %v1048 = vpop.f32.mrf.mxu0
        %v1049 = vadd.f32 %v565, %v1048
        %1050 = vmatmul.bf16.gmra.mxu0 %v862
        %v1051 = vpop.f32.mrf.mxu0
        %v1052 = vadd.f32 %v570, %v1051
        %v1053 = vpop.f32.mrf.mxu0
        %v1054 = vadd.f32 %v575, %v1053
        %1055 = vmatmul.bf16.gmra.mxu0 %v863
        %v1056 = vpop.f32.mrf.mxu0
        %v1057 = vadd.f32 %v580, %v1056
        %v1058 = vpop.f32.mrf.mxu0
        %v1059 = vadd.f32 %v585, %v1058
        %1060 = vmatmul.bf16.gmra.mxu0 %v864
        %v1061 = vpop.f32.mrf.mxu0
        %v1062 = vadd.f32 %v590, %v1061
        %v1063 = vpop.f32.mrf.mxu0
        %v1064 = vadd.f32 %v595, %v1063
        %1065 = vmatmul.bf16.gmra.mxu0 %v865
        %v1066 = vpop.f32.mrf.mxu0
        %v1067 = vadd.f32 %v600, %v1066
        %v1068 = vpop.f32.mrf.mxu0
        %v1069 = vadd.f32 %v605, %v1068
        %1070 = vmatmul.bf16.gmra.mxu0 %v866
        %v1071 = vpop.f32.mrf.mxu0
        %v1072 = vadd.f32 %v610, %v1071
        %v1073 = vpop.f32.mrf.mxu0
        %v1074 = vadd.f32 %v615, %v1073
        %1075 = vmatmul.bf16.gmra.mxu0 %v867
        %v1076 = vpop.f32.mrf.mxu0
        %v1077 = vadd.f32 %v620, %v1076
        %v1078 = vpop.f32.mrf.mxu0
        %v1079 = vadd.f32 %v625, %v1078
        %1080 = vmatmul.bf16.gmra.mxu0 %v868
        %v1081 = vpop.f32.mrf.mxu0
        %v1082 = vadd.f32 %v630, %v1081
        %v1083 = vpop.f32.mrf.mxu0
        %v1084 = vadd.f32 %v635, %v1083
        %1085 = vmatmul.bf16.gmra.mxu0 %v869
        %v1086 = vpop.f32.mrf.mxu0
        %v1087 = vadd.f32 %v640, %v1086
        %v1088 = vpop.f32.mrf.mxu0
        %v1089 = vadd.f32 %v645, %v1088
        %1090 = vmatmul.bf16.gmra.mxu0 %v870
        %v1091 = vpop.f32.mrf.mxu0
        %v1092 = vadd.f32 %v650, %v1091
        %v1093 = vpop.f32.mrf.mxu0
        %v1094 = vadd.f32 %v655, %v1093
        %1095 = vmatmul.bf16.gmra.mxu0 %v871
        %v1096 = vpop.f32.mrf.mxu0
        %v1097 = vadd.f32 %v660, %v1096
        %v1098 = vpop.f32.mrf.mxu0
        %v1099 = vadd.f32 %v665, %v1098
        %1100 = vmatmul.bf16.gmra.mxu0 %v872
        %v1101 = vpop.f32.mrf.mxu0
        %v1102 = vadd.f32 %v670, %v1101
        %v1103 = vpop.f32.mrf.mxu0
        %v1104 = vadd.f32 %v675, %v1103
        %1105 = vmatmul.bf16.gmra.mxu0 %v873
        %v1106 = vpop.f32.mrf.mxu0
        %v1107 = vadd.f32 %v680, %v1106
        %v1108 = vpop.f32.mrf.mxu0
        %v1109 = vadd.f32 %v685, %v1108
        %1110 = vmatmul.bf16.gmra.mxu0 %v874
        %v1111 = vpop.f32.mrf.mxu0
        %v1112 = vadd.f32 %v690, %v1111
        %v1113 = vpop.f32.mrf.mxu0
        %v1114 = vadd.f32 %v695, %v1113
        %1115 = vmatmul.bf16.gmra.mxu0 %v875
        %v1116 = vpop.f32.mrf.mxu0
        %v1117 = vadd.f32 %v700, %v1116
        %v1118 = vpop.f32.mrf.mxu0
        %v1119 = vadd.f32 %v705, %v1118
        %1120 = vmatmul.bf16.gmra.mxu0 %v876
        %v1121 = vpop.f32.mrf.mxu0
        %v1122 = vadd.f32 %v710, %v1121
        %v1123 = vpop.f32.mrf.mxu0
        %v1124 = vadd.f32 %v715, %v1123
        %1125 = vdwg.mxu0
        %v1126 = vld [vmem:[#allocation6] sm:$0x1]
        %v1127 = vadd.f32 %v967, %v969
        %v1128 = vadd.f32 %v1127, %v972
        %v1129 = vadd.f32 %v1128, %v974
        %v1130 = vadd.f32 %v1129, %v977
        %v1131 = vadd.f32 %v1130, %v979
        %v1132 = vadd.f32 %v1131, %v982
        %v1133 = vadd.f32 %v1132, %v984
        %v1134 = vadd.f32 %v1133, %v987
        %v1135 = vadd.f32 %v1134, %v989
        %v1136 = vadd.f32 %v1135, %v992
        %v1137 = vadd.f32 %v1136, %v994
        %v1138 = vadd.f32 %v1137, %v997
        %v1139 = vadd.f32 %v1138, %v999
        %v1140 = vadd.f32 %v1139, %v1002
        %v1141 = vadd.f32 %v1140, %v1004
        %v1142 = vadd.f32 %v1141, %v1007
        %v1143 = vadd.f32 %v1142, %v1009
        %v1144 = vadd.f32 %v1143, %v1012
        %v1145 = vadd.f32 %v1144, %v1014
        %v1146 = vadd.f32 %v1145, %v1017
        %v1147 = vadd.f32 %v1146, %v1019
        %v1148 = vadd.f32 %v1147, %v1022
        %v1149 = vadd.f32 %v1148, %v1024
        %v1150 = vadd.f32 %v1149, %v1027
        %v1151 = vadd.f32 %v1150, %v1029
        %v1152 = vadd.f32 %v1151, %v1032
        %v1153 = vadd.f32 %v1152, %v1034
        %v1154 = vadd.f32 %v1153, %v1037
        %v1155 = vadd.f32 %v1154, %v1039
        %v1156 = vadd.f32 %v1155, %v1042
        %v1157 = vadd.f32 %v1156, %v1044
        %v1158 = vadd.f32 %v1157, %v1047
        %v1159 = vadd.f32 %v1158, %v1049
        %v1160 = vadd.f32 %v1159, %v1052
        %v1161 = vadd.f32 %v1160, %v1054
        %v1162 = vadd.f32 %v1161, %v1057
        %v1163 = vadd.f32 %v1162, %v1059
        %v1164 = vadd.f32 %v1163, %v1062
        %v1165 = vadd.f32 %v1164, %v1064
        %v1166 = vadd.f32 %v1165, %v1067
        %v1167 = vadd.f32 %v1166, %v1069
        %v1168 = vadd.f32 %v1167, %v1072
        %v1169 = vadd.f32 %v1168, %v1074
        %v1170 = vadd.f32 %v1169, %v1077
        %v1171 = vadd.f32 %v1170, %v1079
        %v1172 = vadd.f32 %v1171, %v1082
        %v1173 = vadd.f32 %v1172, %v1084
        %v1174 = vadd.f32 %v1173, %v1087
        %v1175 = vadd.f32 %v1174, %v1089
        %v1176 = vadd.f32 %v1175, %v1092
        %v1177 = vadd.f32 %v1176, %v1094
        %v1178 = vadd.f32 %v1177, %v1097
        %v1179 = vadd.f32 %v1178, %v1099
        %v1180 = vadd.f32 %v1179, %v1102
        %v1181 = vadd.f32 %v1180, %v1104
        %v1182 = vadd.f32 %v1181, %v1107
        %v1183 = vadd.f32 %v1182, %v1109
        %v1184 = vadd.f32 %v1183, %v1112
        %v1185 = vadd.f32 %v1184, %v1114
        %v1186 = vadd.f32 %v1185, %v1117
        %v1187 = vadd.f32 %v1186, %v1119
        %v1188 = vadd.f32 %v1187, %v1122
        %v1189 = vadd.f32 %v1188, %v1124
        %v1190 = vrot.slane %v1189, 4
        %v1191 = vadd.f32 %v1189, %v1190
        %v1192 = vrot.slane %v1191, 2
        %v1193 = vadd.f32 %v1191, %v1192
        %v1194 = vrot.slane %v1193, 1
        %v1195 = vadd.f32 %v1193, %v1194
        %v1196 = vadd.f32 %v1126, %v1195
        %1197 = vst [vmem:[#allocation6] sm:$0x1] %v1196
        %v1198 = vld [vmem:[#allocation2] sm:$0x1]
        %v1199 = vmax.f32 %v967, %v977
        %v1200 = vmax.f32 %v969, %v979
        %v1201 = vmax.f32 %v972, %v982
        %v1202 = vmax.f32 %v974, %v984
        %v1203 = vmax.f32 %v1199, %v987
        %v1204 = vmax.f32 %v1200, %v989
        %v1205 = vmax.f32 %v1201, %v992
        %v1206 = vmax.f32 %v1202, %v994
        %v1207 = vmax.f32 %v1203, %v997
        %v1208 = vmax.f32 %v1204, %v999
        %v1209 = vmax.f32 %v1205, %v1002
        %v1210 = vmax.f32 %v1206, %v1004
        %v1211 = vmax.f32 %v1207, %v1007
        %v1212 = vmax.f32 %v1208, %v1009
        %v1213 = vmax.f32 %v1209, %v1012
        %v1214 = vmax.f32 %v1210, %v1014
        %v1215 = vmax.f32 %v1211, %v1017
        %v1216 = vmax.f32 %v1212, %v1019
        %v1217 = vmax.f32 %v1213, %v1022
        %v1218 = vmax.f32 %v1214, %v1024
        %v1219 = vmax.f32 %v1215, %v1027
        %v1220 = vmax.f32 %v1216, %v1029
        %v1221 = vmax.f32 %v1217, %v1032
        %v1222 = vmax.f32 %v1218, %v1034
        %v1223 = vmax.f32 %v1219, %v1037
        %v1224 = vmax.f32 %v1220, %v1039
        %v1225 = vmax.f32 %v1221, %v1042
        %v1226 = vmax.f32 %v1222, %v1044
        %v1227 = vmax.f32 %v1223, %v1047
        %v1228 = vmax.f32 %v1224, %v1049
        %v1229 = vmax.f32 %v1225, %v1052
        %v1230 = vmax.f32 %v1226, %v1054
        %v1231 = vmax.f32 %v1227, %v1057
        %v1232 = vmax.f32 %v1228, %v1059
        %v1233 = vmax.f32 %v1229, %v1062
        %v1234 = vmax.f32 %v1230, %v1064
        %v1235 = vmax.f32 %v1231, %v1067
        %v1236 = vmax.f32 %v1232, %v1069
        %v1237 = vmax.f32 %v1233, %v1072
        %v1238 = vmax.f32 %v1234, %v1074
        %v1239 = vmax.f32 %v1235, %v1077
        %v1240 = vmax.f32 %v1236, %v1079
        %v1241 = vmax.f32 %v1237, %v1082
        %v1242 = vmax.f32 %v1238, %v1084
        %v1243 = vmax.f32 %v1239, %v1087
        %v1244 = vmax.f32 %v1240, %v1089
        %v1245 = vmax.f32 %v1241, %v1092
        %v1246 = vmax.f32 %v1242, %v1094
        %v1247 = vmax.f32 %v1243, %v1097
        %v1248 = vmax.f32 %v1244, %v1099
        %v1249 = vmax.f32 %v1245, %v1102
        %v1250 = vmax.f32 %v1246, %v1104
        %v1251 = vmax.f32 %v1247, %v1107
        %v1252 = vmax.f32 %v1248, %v1109
        %v1253 = vmax.f32 %v1249, %v1112
        %v1254 = vmax.f32 %v1250, %v1114
        %v1255 = vmax.f32 %v1251, %v1117
        %v1256 = vmax.f32 %v1252, %v1119
        %v1257 = vmax.f32 %v1253, %v1122
        %v1258 = vmax.f32 %v1254, %v1124
        %v1259 = vmax.f32 %v1255, %v1256
        %v1260 = vmax.f32 %v1257, %v1258
        %v1261 = vmax.f32 %v1259, %v1260
        %v1262 = vrot.slane %v1261, 4
        %v1263 = vmax.f32 %v1261, %v1262
        %v1264 = vrot.slane %v1263, 2
        %v1265 = vmax.f32 %v1263, %v1264
        %v1266 = vrot.slane %v1265, 1
        %v1267 = vmax.f32 %v1265, %v1266
        %v1268 = vmax.f32 %v1198, %v1267
        %v1269 = vld [vmem:[#allocation3] sm:$0x1]
        %v1270 = vsub.f32 %v1198, %v1268
        %v1271 = vmul.f32 %v1270, 1.442695
        %v1272 = vpow.pop %v1271
        %v1273 = vmul.f32 %v1269, %v1272
        %v1275 = vperm.slane %v1268, 0
        %v1277 = vsub.f32 %v967, %v1275
        %v1278 = vsub.f32 %v969, %v1275
        %v1279 = vsub.f32 %v972, %v1275
        %v1280 = vsub.f32 %v974, %v1275
        %v1281 = vsub.f32 %v977, %v1275
        %v1282 = vsub.f32 %v979, %v1275
        %v1283 = vsub.f32 %v982, %v1275
        %v1284 = vsub.f32 %v984, %v1275
        %v1285 = vsub.f32 %v987, %v1275
        %v1286 = vsub.f32 %v989, %v1275
        %v1287 = vsub.f32 %v992, %v1275
        %v1288 = vsub.f32 %v994, %v1275
        %v1289 = vsub.f32 %v997, %v1275
        %v1290 = vsub.f32 %v999, %v1275
        %v1291 = vsub.f32 %v1002, %v1275
        %v1292 = vsub.f32 %v1004, %v1275
        %v1293 = vsub.f32 %v1007, %v1275
        %v1294 = vsub.f32 %v1009, %v1275
        %v1295 = vsub.f32 %v1012, %v1275
        %v1296 = vsub.f32 %v1014, %v1275
        %v1297 = vsub.f32 %v1017, %v1275
        %v1298 = vsub.f32 %v1019, %v1275
        %v1299 = vsub.f32 %v1022, %v1275
        %v1300 = vsub.f32 %v1024, %v1275
        %v1301 = vsub.f32 %v1027, %v1275
        %v1302 = vsub.f32 %v1029, %v1275
        %v1303 = vsub.f32 %v1032, %v1275
        %v1304 = vsub.f32 %v1034, %v1275
        %v1305 = vsub.f32 %v1037, %v1275
        %v1306 = vsub.f32 %v1039, %v1275
        %v1307 = vsub.f32 %v1042, %v1275
        %v1308 = vsub.f32 %v1044, %v1275
        %v1309 = vsub.f32 %v1047, %v1275
        %v1310 = vsub.f32 %v1049, %v1275
        %v1311 = vsub.f32 %v1052, %v1275
        %v1312 = vsub.f32 %v1054, %v1275
        %v1313 = vsub.f32 %v1057, %v1275
        %v1314 = vsub.f32 %v1059, %v1275
        %v1315 = vsub.f32 %v1062, %v1275
        %v1316 = vsub.f32 %v1064, %v1275
        %v1317 = vsub.f32 %v1067, %v1275
        %v1318 = vsub.f32 %v1069, %v1275
        %v1319 = vsub.f32 %v1072, %v1275
        %v1320 = vsub.f32 %v1074, %v1275
        %v1321 = vsub.f32 %v1077, %v1275
        %v1322 = vsub.f32 %v1079, %v1275
        %v1323 = vsub.f32 %v1082, %v1275
        %v1324 = vsub.f32 %v1084, %v1275
        %v1325 = vsub.f32 %v1087, %v1275
        %v1326 = vsub.f32 %v1089, %v1275
        %v1327 = vsub.f32 %v1092, %v1275
        %v1328 = vsub.f32 %v1094, %v1275
        %v1329 = vsub.f32 %v1097, %v1275
        %v1330 = vsub.f32 %v1099, %v1275
        %v1331 = vsub.f32 %v1102, %v1275
        %v1332 = vsub.f32 %v1104, %v1275
        %v1333 = vsub.f32 %v1107, %v1275
        %v1334 = vsub.f32 %v1109, %v1275
        %v1335 = vsub.f32 %v1112, %v1275
        %v1336 = vsub.f32 %v1114, %v1275
        %v1337 = vsub.f32 %v1117, %v1275
        %v1338 = vsub.f32 %v1119, %v1275
        %v1339 = vsub.f32 %v1122, %v1275
        %v1340 = vsub.f32 %v1124, %v1275
        %v1341 = vmul.f32 %v1277, 1.442695
        %v1342 = vpow.pop %v1341
        %v1343 = vmul.f32 %v1278, 1.442695
        %v1344 = vpow.pop %v1343
        %v1345 = vmul.f32 %v1279, 1.442695
        %v1346 = vpow.pop %v1345
        %v1347 = vmul.f32 %v1280, 1.442695
        %v1348 = vpow.pop %v1347
        %v1349 = vmul.f32 %v1281, 1.442695
        %v1350 = vpow.pop %v1349
        %v1351 = vmul.f32 %v1282, 1.442695
        %v1352 = vpow.pop %v1351
        %v1353 = vmul.f32 %v1283, 1.442695
        %v1354 = vpow.pop %v1353
        %v1355 = vmul.f32 %v1284, 1.442695
        %v1356 = vpow.pop %v1355
        %v1357 = vmul.f32 %v1285, 1.442695
        %v1358 = vpow.pop %v1357
        %v1359 = vmul.f32 %v1286, 1.442695
        %v1360 = vpow.pop %v1359
        %v1361 = vmul.f32 %v1287, 1.442695
        %v1362 = vpow.pop %v1361
        %v1363 = vmul.f32 %v1288, 1.442695
        %v1364 = vpow.pop %v1363
        %v1365 = vmul.f32 %v1289, 1.442695
        %v1366 = vpow.pop %v1365
        %v1367 = vmul.f32 %v1290, 1.442695
        %v1368 = vpow.pop %v1367
        %v1369 = vmul.f32 %v1291, 1.442695
        %v1370 = vpow.pop %v1369
        %v1371 = vmul.f32 %v1292, 1.442695
        %v1372 = vpow.pop %v1371
        %v1373 = vmul.f32 %v1293, 1.442695
        %v1374 = vpow.pop %v1373
        %v1375 = vmul.f32 %v1294, 1.442695
        %v1376 = vpow.pop %v1375
        %v1377 = vmul.f32 %v1295, 1.442695
        %v1378 = vpow.pop %v1377
        %v1379 = vmul.f32 %v1296, 1.442695
        %v1380 = vpow.pop %v1379
        %v1381 = vmul.f32 %v1297, 1.442695
        %v1382 = vpow.pop %v1381
        %v1383 = vmul.f32 %v1298, 1.442695
        %v1384 = vpow.pop %v1383
        %v1385 = vmul.f32 %v1299, 1.442695
        %v1386 = vpow.pop %v1385
        %v1387 = vmul.f32 %v1300, 1.442695
        %v1388 = vpow.pop %v1387
        %v1389 = vmul.f32 %v1301, 1.442695
        %v1390 = vpow.pop %v1389
        %v1391 = vmul.f32 %v1302, 1.442695
        %v1392 = vpow.pop %v1391
        %v1393 = vmul.f32 %v1303, 1.442695
        %v1394 = vpow.pop %v1393
        %v1395 = vmul.f32 %v1304, 1.442695
        %v1396 = vpow.pop %v1395
        %v1397 = vmul.f32 %v1305, 1.442695
        %v1398 = vpow.pop %v1397
        %v1399 = vmul.f32 %v1306, 1.442695
        %v1400 = vpow.pop %v1399
        %v1401 = vmul.f32 %v1307, 1.442695
        %v1402 = vpow.pop %v1401
        %v1403 = vmul.f32 %v1308, 1.442695
        %v1404 = vpow.pop %v1403
        %v1405 = vmul.f32 %v1309, 1.442695
        %v1406 = vpow.pop %v1405
        %v1407 = vmul.f32 %v1310, 1.442695
        %v1408 = vpow.pop %v1407
        %v1409 = vmul.f32 %v1311, 1.442695
        %v1410 = vpow.pop %v1409
        %v1411 = vmul.f32 %v1312, 1.442695
        %v1412 = vpow.pop %v1411
        %v1413 = vmul.f32 %v1313, 1.442695
        %v1414 = vpow.pop %v1413
        %v1415 = vmul.f32 %v1314, 1.442695
        %v1416 = vpow.pop %v1415
        %v1417 = vmul.f32 %v1315, 1.442695
        %v1418 = vpow.pop %v1417
        %v1419 = vmul.f32 %v1316, 1.442695
        %v1420 = vpow.pop %v1419
        %v1421 = vmul.f32 %v1317, 1.442695
        %v1422 = vpow.pop %v1421
        %v1423 = vmul.f32 %v1318, 1.442695
        %v1424 = vpow.pop %v1423
        %v1425 = vmul.f32 %v1319, 1.442695
        %v1426 = vpow.pop %v1425
        %v1427 = vmul.f32 %v1320, 1.442695
        %v1428 = vpow.pop %v1427
        %v1429 = vmul.f32 %v1321, 1.442695
        %v1430 = vpow.pop %v1429
        %v1431 = vmul.f32 %v1322, 1.442695
        %v1432 = vpow.pop %v1431
        %v1433 = vmul.f32 %v1323, 1.442695
        %v1434 = vpow.pop %v1433
        %v1435 = vmul.f32 %v1324, 1.442695
        %v1436 = vpow.pop %v1435
        %v1437 = vmul.f32 %v1325, 1.442695
        %v1438 = vpow.pop %v1437
        %v1439 = vmul.f32 %v1326, 1.442695
        %v1440 = vpow.pop %v1439
        %v1441 = vmul.f32 %v1327, 1.442695
        %v1442 = vpow.pop %v1441
        %v1443 = vmul.f32 %v1328, 1.442695
        %v1444 = vpow.pop %v1443
        %v1445 = vmul.f32 %v1329, 1.442695
        %v1446 = vpow.pop %v1445
        %v1447 = vmul.f32 %v1330, 1.442695
        %v1448 = vpow.pop %v1447
        %v1449 = vmul.f32 %v1331, 1.442695
        %v1450 = vpow.pop %v1449
        %v1451 = vmul.f32 %v1332, 1.442695
        %v1452 = vpow.pop %v1451
        %v1453 = vmul.f32 %v1333, 1.442695
        %v1454 = vpow.pop %v1453
        %v1455 = vmul.f32 %v1334, 1.442695
        %v1456 = vpow.pop %v1455
        %v1457 = vmul.f32 %v1335, 1.442695
        %v1458 = vpow.pop %v1457
        %v1459 = vmul.f32 %v1336, 1.442695
        %v1460 = vpow.pop %v1459
        %v1461 = vmul.f32 %v1337, 1.442695
        %v1462 = vpow.pop %v1461
        %v1463 = vmul.f32 %v1338, 1.442695
        %v1464 = vpow.pop %v1463
        %v1465 = vmul.f32 %v1339, 1.442695
        %v1466 = vpow.pop %v1465
        %v1467 = vmul.f32 %v1340, 1.442695
        %v1468 = vpow.pop %v1467
        %v1469 = vadd.f32 %v1342, %v1344
        %v1470 = vadd.f32 %v1469, %v1346
        %v1471 = vadd.f32 %v1470, %v1348
        %v1472 = vadd.f32 %v1471, %v1350
        %v1473 = vadd.f32 %v1472, %v1352
        %v1474 = vadd.f32 %v1473, %v1354
        %v1475 = vadd.f32 %v1474, %v1356
        %v1476 = vadd.f32 %v1475, %v1358
        %v1477 = vadd.f32 %v1476, %v1360
        %v1478 = vadd.f32 %v1477, %v1362
        %v1479 = vadd.f32 %v1478, %v1364
        %v1480 = vadd.f32 %v1479, %v1366
        %v1481 = vadd.f32 %v1480, %v1368
        %v1482 = vadd.f32 %v1481, %v1370
        %v1483 = vadd.f32 %v1482, %v1372
        %v1484 = vadd.f32 %v1483, %v1374
        %v1485 = vadd.f32 %v1484, %v1376
        %v1486 = vadd.f32 %v1485, %v1378
        %v1487 = vadd.f32 %v1486, %v1380
        %v1488 = vadd.f32 %v1487, %v1382
        %v1489 = vadd.f32 %v1488, %v1384
        %v1490 = vadd.f32 %v1489, %v1386
        %v1491 = vadd.f32 %v1490, %v1388
        %v1492 = vadd.f32 %v1491, %v1390
        %v1493 = vadd.f32 %v1492, %v1392
        %v1494 = vadd.f32 %v1493, %v1394
        %v1495 = vadd.f32 %v1494, %v1396
        %v1496 = vadd.f32 %v1495, %v1398
        %v1497 = vadd.f32 %v1496, %v1400
        %v1498 = vadd.f32 %v1497, %v1402
        %v1499 = vadd.f32 %v1498, %v1404
        %v1500 = vadd.f32 %v1499, %v1406
        %v1501 = vadd.f32 %v1500, %v1408
        %v1502 = vadd.f32 %v1501, %v1410
        %v1503 = vadd.f32 %v1502, %v1412
        %v1504 = vadd.f32 %v1503, %v1414
        %v1505 = vadd.f32 %v1504, %v1416
        %v1506 = vadd.f32 %v1505, %v1418
        %v1507 = vadd.f32 %v1506, %v1420
        %v1508 = vadd.f32 %v1507, %v1422
        %v1509 = vadd.f32 %v1508, %v1424
        %v1510 = vadd.f32 %v1509, %v1426
        %v1511 = vadd.f32 %v1510, %v1428
        %v1512 = vadd.f32 %v1511, %v1430
        %v1513 = vadd.f32 %v1512, %v1432
        %v1514 = vadd.f32 %v1513, %v1434
        %v1515 = vadd.f32 %v1514, %v1436
        %v1516 = vadd.f32 %v1515, %v1438
        %v1517 = vadd.f32 %v1516, %v1440
        %v1518 = vadd.f32 %v1517, %v1442
        %v1519 = vadd.f32 %v1518, %v1444
        %v1520 = vadd.f32 %v1519, %v1446
        %v1521 = vadd.f32 %v1520, %v1448
        %v1522 = vadd.f32 %v1521, %v1450
        %v1523 = vadd.f32 %v1522, %v1452
        %v1524 = vadd.f32 %v1523, %v1454
        %v1525 = vadd.f32 %v1524, %v1456
        %v1526 = vadd.f32 %v1525, %v1458
        %v1527 = vadd.f32 %v1526, %v1460
        %v1528 = vadd.f32 %v1527, %v1462
        %v1529 = vadd.f32 %v1528, %v1464
        %v1530 = vadd.f32 %v1529, %v1466
        %v1531 = vadd.f32 %v1530, %v1468
        %v1532 = vrot.slane %v1531, 4
        %v1533 = vadd.f32 %v1531, %v1532
        %v1534 = vrot.slane %v1533, 2
        %v1535 = vadd.f32 %v1533, %v1534
        %v1536 = vrot.slane %v1535, 1
        %v1537 = vadd.f32 %v1535, %v1536
        %v1538 = vadd.f32 %v1273, %v1537
        %1539 = vst [vmem:[#allocation3] sm:$0x1] %v1538
        %1540 = vst [vmem:[#allocation2] sm:$0x1] %v1268
        %p1541 = scmp.eq.s32.totalorder %s23, 3
        // Predicated region
        $region37: #{tpu_custom_call.1} parent=31 // pred_check
          %p1542 = pneg %p1541
        $region38: #{tpu_custom_call.1} parent=31 // pred_check_branch
          %1544 = sbr.rel (%p1542) target = $region40
        $region39: #{tpu_custom_call.1} parent=31 // pred_region
          %v1545 = vld [vmem:[#allocation2] sm:$0x1]
          %v1546 = vld [vmem:[#allocation3] sm:$0x1]
          %v1547 = vlog2.pop %v1546
          %v1548 = vmul.f32 %v1547, 0.6931472
          %v1549 = vadd.f32 %v1545, %v1548
          %1550 = vst [vmem:[#allocation4] sm:$0x1] %v1549
        $region40: #{tpu_custom_call.1} parent=31 // pred_fallthru
          _
        // Predicated region
        $region41: #{tpu_custom_call.1} parent=31 // pred_check
          %p1551 = pneg %p126
        $region42: #{tpu_custom_call.1} parent=31 // pred_check_branch
          %1553 = sbr.rel (%p1551) target = $region44
        $region43: #{tpu_custom_call.1} parent=31 // pred_region
          %1555 = vsyncadd [#allocation5], 0
          %s1556 = scalar_lea.hbm %s3, %s22
          %s1558 = sshll.u32 [#allocation4], 4
          %s1559 = int_to_ptr.vmem [resolvable:$true] %s1558
          %s1560 = sshll.u32 %s1556, 4
          %s1561 = int_to_ptr.hbm [resolvable:$true] %s1560
          %1563 = dma.vmem_to_hbm [thread:$0]  %s1559, 16, %s1561, [#allocation5]
        $region44: #{tpu_custom_call.1} parent=31 // pred_fallthru
          _
        // Predicated region
        $region45: #{tpu_custom_call.1} parent=31 // pred_check
          %p1564 = pneg %p152
        $region46: #{tpu_custom_call.1} parent=31 // pred_check_branch
          %1566 = sbr.rel (%p1564) target = $region48
        $region47: #{tpu_custom_call.1} parent=31 // pred_region
          %1568 = vsyncadd [#allocation7], 0
          %s1569 = scalar_lea.hbm %s4, %s22
          %s1571 = sshll.u32 [#allocation6], 4
          %s1572 = int_to_ptr.vmem [resolvable:$true] %s1571
          %s1573 = sshll.u32 %s1569, 4
          %s1574 = int_to_ptr.hbm [resolvable:$true] %s1573
          %1576 = dma.vmem_to_hbm [thread:$0]  %s1572, 16, %s1574, [#allocation7]
        $region48: #{tpu_custom_call.1} parent=31 // pred_fallthru
          _
        // Predicated region
        $region49: #{tpu_custom_call.1} parent=31 // pred_check
          %p1577 = pneg %p126
        $region50: #{tpu_custom_call.1} parent=31 // pred_check_branch
          %1579 = sbr.rel (%p1577) target = $region52
        $region51: #{tpu_custom_call.1} parent=31 // pred_region
          %1581 = dma.done [#allocation5], 16
        $region52: #{tpu_custom_call.1} parent=31 // pred_fallthru
          _
        // Predicated region
        $region53: #{tpu_custom_call.1} parent=31 // pred_check
          %p1582 = pneg %p152
        $region54: #{tpu_custom_call.1} parent=31 // pred_check_branch
          %1584 = sbr.rel (%p1582) target = $region56
        $region55: #{tpu_custom_call.1} parent=31 // pred_region
          %1586 = dma.done [#allocation7], 16
        $region56: #{tpu_custom_call.1} parent=31 // pred_fallthru
          _
      $region32: #{tpu_custom_call.1} parent=5 // pred_fallthru
        _
      %p1587 = scmp.le.s32.totalorder 2, %s13
      // Predicated region
      $region57: #{tpu_custom_call.1} parent=5 // pred_check
        %p1588 = pneg %p1587
      $region58: #{tpu_custom_call.1} parent=5 // pred_check_branch
        %1590 = sbr.rel (%p1588) target = $region60
      $region59: #{tpu_custom_call.1} parent=5 // pred_region
        %s1591 = ssub.s32 %s13, 2
      $region60: #{tpu_custom_call.1} parent=5 // pred_fallthru
        _
    $region6: #{tpu_custom_call.1} parent=1 // loop_footer
      %s17 = sadd.s32 1, %s13
    $region7: #{tpu_custom_call.1} parent=1 // loop_footer_branch
      %12 = sbr.rel target = $region3
    $region8: #{tpu_custom_call.1} parent=1 // loop_exit
      _
    %1592 = vsyncpa [#allocation5], 1
    %s1593 = scalar_lea.sflag [#allocation5], 1
    %1594 = vsyncpa %s1593, 1
    %1595 = vsyncpa [#allocation7], 1

// kernel: tpu_custom_call.1
$region0: #{tpu_custom_call.1}
  #allocation0 [shape = 'u32[]', space=smem, size = 0x4, offset = 0x4, fixed_abs, tag = 'smem constant byte address 0x4 - core index']
  #allocation1 [shape = 'u32[72,128]{1,0:T(1,128)}', space=vmem, size = 0x9000, scoped, tag = 'internal scratch']
  #allocation2 [shape = 'f32[1,128]{1,0:T(1,128)}', space=vmem, size = 0x200, scoped, tag = 'scratch operand']
  #allocation3 [shape = 'f32[1,128]{1,0:T(1,128)}', space=vmem, size = 0x200, scoped, tag = 'scratch operand']
  %s0 = inlined_call_operand.vmem [shape: bf16[128,128], index: 0, kind: input, shape index: {}]
  %s1 = inlined_call_operand.vmem [shape: bf16[2048,128], index: 1, kind: input, shape index: {}]
  %s2 = inlined_call_operand.vmem [shape: f32[2048,1], index: 2, kind: input, shape index: {}]
  %s3 = inlined_call_operand.hbm [shape: f32[1,128], index: 3, kind: output, shape index: {0}]
  %s4 = inlined_call_operand.hbm [shape: f32[1,128], index: 4, kind: output, shape index: {1}]
  %5 = xla_tuple %s3, %s4
  %s6 = sld [smem:[#allocation0]]
  $region61: #{tpu_custom_call.1} parent=0
    _
  %s8 = ssub.s32 1, %s6
  %s9 = scalar_select 0, %s8, %s6
  $region1: #{tpu_custom_call.1} parent=0
    #allocation4 [shape = 'u8[512]{0}', space=vmem, size = 0x400, scoped, tag = 'output window, operand 0, single buffered']
    #allocation5 [shape = 's32[2]{0}', space=sflag, size = 0x8, scoped, tag = 'scoped memory for tpu_custom_call.1']
    #allocation6 [shape = 'u8[512]{0}', space=vmem, size = 0x400, scoped, tag = 'output window, operand 1, single buffered']
    #allocation7 [shape = 's32[1]{0}', space=sflag, size = 0x4, scoped, tag = 'scoped memory for tpu_custom_call.1']
    %10 = vsyncpa [#allocation5], 0
    %11 = vsyncpa [#allocation7], 0
    loop: start=0, step=1, limit=6
    $region2: #{tpu_custom_call.1} parent=1 // loop_pre_header
      _
    $region3: #{tpu_custom_call.1} parent=1 // loop_header
      %s13 = sphi 0, %s17
      %p14 = scmp.ge.s32.totalorder %s13, 6
      %s20 = sphi 0, %s32
      %s21 = sphi 0, %s28
      %s22 = sphi 0, %s20
      %s23 = sphi 0, %s21
      %s24 = sphi 0, %s22
      %s25 = sphi 0, %s23
      %s35 = sphi 0, %s37
      %s38 = sphi 0, %s35
      %s39 = sphi 0, %s38
      %s55 = sphi 0, %s39
      %s61 = sphi 0, %s63
      %s64 = sphi 0, %s61
      %s65 = sphi 0, %s64
      %s81 = sphi 0, %s65
      %s87 = sphi 0, %s89
      %s90 = sphi 0, %s87
      %s91 = sphi 0, %s90
      %s107 = sphi 0, %s91
      %s113 = sphi 0, %s115
      %s116 = sphi 0, %s113
      %s117 = sphi 0, %s116
      %s133 = sphi 0, %s117
      %s139 = sphi 0, %s141
      %s142 = sphi 0, %s139
      %s143 = sphi 0, %s142
      %s159 = sphi 0, %s143
    $region4: #{tpu_custom_call.1} parent=1 // loop_header_branch
      %16 = sbr.rel (%p14) target = $region8
    $region5: #{tpu_custom_call.1} parent=1 // loop_body
      %s18 = ssub.s32 %s13, 1
      %s19 = ssub.s32 %s13, 2
      %s26 = sadd.s32 1, %s21
      %p27 = scmp.ge.s32.totalorder %s26, 4
      %s28 = scalar_select %p27, 0, %s26
      %s29 = sadd.s32 1, %s20
      %s30 = scalar_select %p27, %s29, %s20
      %p31 = scmp.ge.s32.totalorder %s30, 1
      %s32 = scalar_select %p31, 0, %s30
      %s33 = ssub.s32 %s20, %s32
      %p34 = scmp.eq.s32.totalorder %s33, 0
      %s36 = sadd.s32 %s35, 1
      %s37 = scalar_select %p34, %s35, %s36
      %p40 = pneg %p34
      %p41 = scmp.eq.s32.totalorder %s13, 3
      %p42 = por %p40, %p41
      %p43 = scmp.ne.s32.totalorder %s35, %s38
      %p44 = scmp.eq.s32.totalorder %s13, 0
      %p45 = por %p43, %p44
      %p46 = scmp.ne.s32.totalorder %s35, %s38
      %p47 = scmp.eq.s32.totalorder %s18, 3
      %p48 = por %p46, %p47
      %p49 = scmp.ne.s32.totalorder %s38, %s39
      %p50 = scmp.eq.s32.totalorder %s18, 0
      %p51 = por %p49, %p50
      %p52 = scmp.ne.s32.totalorder %s38, %s39
      %p53 = scmp.eq.s32.totalorder %s19, 3
      %p54 = por %p52, %p53
      %p56 = scmp.ne.s32.totalorder %s39, %s55
      %p57 = scmp.eq.s32.totalorder %s19, 0
      %p58 = por %p56, %p57
      %s59 = ssub.s32 %s21, %s28
      %p60 = scmp.eq.s32.totalorder %s59, 0
      %s62 = sadd.s32 %s61, 1
      %s63 = scalar_select %p60, %s61, %s62
      %p66 = pneg %p60
      %p67 = scmp.eq.s32.totalorder %s13, 3
      %p68 = por %p66, %p67
      %p69 = scmp.ne.s32.totalorder %s61, %s64
      %p70 = scmp.eq.s32.totalorder %s13, 0
      %p71 = por %p69, %p70
      %p72 = scmp.ne.s32.totalorder %s61, %s64
      %p73 = scmp.eq.s32.totalorder %s18, 3
      %p74 = por %p72, %p73
      %p75 = scmp.ne.s32.totalorder %s64, %s65
      %p76 = scmp.eq.s32.totalorder %s18, 0
      %p77 = por %p75, %p76
      %p78 = scmp.ne.s32.totalorder %s64, %s65
      %p79 = scmp.eq.s32.totalorder %s19, 3
      %p80 = por %p78, %p79
      %p82 = scmp.ne.s32.totalorder %s65, %s81
      %p83 = scmp.eq.s32.totalorder %s19, 0
      %p84 = por %p82, %p83
      %s85 = ssub.s32 %s21, %s28
      %p86 = scmp.eq.s32.totalorder %s85, 0
      %s88 = sadd.s32 %s87, 1
      %s89 = scalar_select %p86, %s87, %s88
      %p92 = pneg %p86
      %p93 = scmp.eq.s32.totalorder %s13, 3
      %p94 = por %p92, %p93
      %p95 = scmp.ne.s32.totalorder %s87, %s90
      %p96 = scmp.eq.s32.totalorder %s13, 0
      %p97 = por %p95, %p96
      %p98 = scmp.ne.s32.totalorder %s87, %s90
      %p99 = scmp.eq.s32.totalorder %s18, 3
      %p100 = por %p98, %p99
      %p101 = scmp.ne.s32.totalorder %s90, %s91
      %p102 = scmp.eq.s32.totalorder %s18, 0
      %p103 = por %p101, %p102
      %p104 = scmp.ne.s32.totalorder %s90, %s91
      %p105 = scmp.eq.s32.totalorder %s19, 3
      %p106 = por %p104, %p105
      %p108 = scmp.ne.s32.totalorder %s91, %s107
      %p109 = scmp.eq.s32.totalorder %s19, 0
      %p110 = por %p108, %p109
      %s111 = ssub.s32 %s20, %s32
      %p112 = scmp.eq.s32.totalorder %s111, 0
      %s114 = sadd.s32 %s113, 1
      %s115 = scalar_select %p112, %s113, %s114
      %p118 = pneg %p112
      %p119 = scmp.eq.s32.totalorder %s13, 3
      %p120 = por %p118, %p119
      %p121 = scmp.ne.s32.totalorder %s113, %s116
      %p122 = scmp.eq.s32.totalorder %s13, 0
      %p123 = por %p121, %p122
      %p124 = scmp.ne.s32.totalorder %s113, %s116
      %p125 = scmp.eq.s32.totalorder %s18, 3
      %p126 = por %p124, %p125
      %p127 = scmp.ne.s32.totalorder %s116, %s117
      %p128 = scmp.eq.s32.totalorder %s18, 0
      %p129 = por %p127, %p128
      %p130 = scmp.ne.s32.totalorder %s116, %s117
      %p131 = scmp.eq.s32.totalorder %s19, 3
      %p132 = por %p130, %p131
      %p134 = scmp.ne.s32.totalorder %s117, %s133
      %p135 = scmp.eq.s32.totalorder %s19, 0
      %p136 = por %p134, %p135
      %s137 = ssub.s32 %s20, %s32
      %p138 = scmp.eq.s32.totalorder %s137, 0
      %s140 = sadd.s32 %s139, 1
      %s141 = scalar_select %p138, %s139, %s140
      %p144 = pneg %p138
      %p145 = scmp.eq.s32.totalorder %s13, 3
      %p146 = por %p144, %p145
      %p147 = scmp.ne.s32.totalorder %s139, %s142
      %p148 = scmp.eq.s32.totalorder %s13, 0
      %p149 = por %p147, %p148
      %p150 = scmp.ne.s32.totalorder %s139, %s142
      %p151 = scmp.eq.s32.totalorder %s18, 3
      %p152 = por %p150, %p151
      %p153 = scmp.ne.s32.totalorder %s142, %s143
      %p154 = scmp.eq.s32.totalorder %s18, 0
      %p155 = por %p153, %p154
      %p156 = scmp.ne.s32.totalorder %s142, %s143
      %p157 = scmp.eq.s32.totalorder %s19, 3
      %p158 = por %p156, %p157
      %p160 = scmp.ne.s32.totalorder %s143, %s159
      %p161 = scmp.eq.s32.totalorder %s19, 0
      %p162 = por %p160, %p161
      %p163 = scmp.le.s32.totalorder 1, %s13
      %p164 = scmp.lt.s32.totalorder %s13, 5
      %p165 = pnand %p163, %p164
      %p166 = pneg %p165
      // Predicated region
      $region9: #{tpu_custom_call.1} parent=5 // pred_check
        _
      $region10: #{tpu_custom_call.1} parent=5 // pred_check_branch
        %168 = sbr.rel (%p165) target = $region12
      $region11: #{tpu_custom_call.1} parent=5 // pred_region
        %s169 = ssub.s32 %s13, 1
        // Predicated region
        $region13: #{tpu_custom_call.1} parent=11 // pred_check
          %p170 = pneg %p51
        $region14: #{tpu_custom_call.1} parent=11 // pred_check_branch
          %172 = sbr.rel (%p170) target = $region16
        $region15: #{tpu_custom_call.1} parent=11 // pred_region
          %p173 = scmp.lt.s32.totalorder %s22, 0
          %s174 = scalar_select %p173, %s22, 0
          %s175 = smul.addr %s174, 4
          %s176 = scalar_lea.vmem %s0, %s175
        $region16: #{tpu_custom_call.1} parent=11 // pred_fallthru
          _
      $region12: #{tpu_custom_call.1} parent=5 // pred_fallthru
        _
      %p177 = scmp.lt.s32.totalorder %s13, 4
      // Predicated region
      $region17: #{tpu_custom_call.1} parent=5 // pred_check
        %p178 = pneg %p177
      $region18: #{tpu_custom_call.1} parent=5 // pred_check_branch
        %180 = sbr.rel (%p178) target = $region20
      $region19: #{tpu_custom_call.1} parent=5 // pred_region
        // Predicated region
        $region21: #{tpu_custom_call.1} parent=19 // pred_check
          %p181 = pneg %p71
        $region22: #{tpu_custom_call.1} parent=19 // pred_check_branch
          %183 = sbr.rel (%p181) target = $region24
        $region23: #{tpu_custom_call.1} parent=19 // pred_region
          %s184 = smul.u32 64, %s21
          %p185 = scmp.lt.s32.totalorder %s184, 255
          %s186 = scalar_select %p185, %s184, 255
          %s187 = smul.addr %s186, 4
          %s188 = scalar_lea.vmem %s1, %s187
          %s189 = smul.u32 64, %s21
        $region24: #{tpu_custom_call.1} parent=19 // pred_fallthru
          _
        // Predicated region
        $region25: #{tpu_custom_call.1} parent=19 // pred_check
          %p190 = pneg %p97
        $region26: #{tpu_custom_call.1} parent=19 // pred_check_branch
          %192 = sbr.rel (%p190) target = $region28
        $region27: #{tpu_custom_call.1} parent=19 // pred_region
          %s193 = smul.u32 64, %s21
          %p194 = scmp.lt.s32.totalorder %s193, 255
          %s195 = scalar_select %p194, %s193, 255
          %s196 = smul.addr %s195, 8
          %s197 = scalar_lea.vmem %s2, %s196
          %s198 = smul.u32 64, %s21
        $region28: #{tpu_custom_call.1} parent=19 // pred_fallthru
          _
      $region20: #{tpu_custom_call.1} parent=5 // pred_fallthru
        _
      %p199 = scmp.le.s32.totalorder 1, %s13
      %p200 = scmp.lt.s32.totalorder %s13, 5
      %p201 = pnand %p199, %p200
      %p202 = pneg %p201
      // Predicated region
      $region29: #{tpu_custom_call.1} parent=5 // pred_check
        _
      $region30: #{tpu_custom_call.1} parent=5 // pred_check_branch
        %204 = sbr.rel (%p201) target = $region32
      $region31: #{tpu_custom_call.1} parent=5 // pred_region
        %s205 = ssub.s32 %s13, 1
        %p206 = scmp.lt.s32.totalorder %s22, 0
        %s207 = scalar_select %p206, %s22, 0
        %s208 = smul.addr %s207, 4
        %s209 = scalar_lea.vmem %s0, %s208
        %p210 = pneg %p51
        %p211 = pneg %p48
        %s212 = smul.u32 64, %s23
        %p213 = scmp.lt.s32.totalorder %s212, 255
        %s214 = scalar_select %p213, %s212, 255
        %s215 = smul.addr %s214, 4
        %s216 = scalar_lea.vmem %s1, %s215
        %p217 = pneg %p77
        %p218 = pneg %p74
        %s219 = smul.u32 64, %s23
        %p220 = scmp.lt.s32.totalorder %s219, 255
        %s221 = scalar_select %p220, %s219, 255
        %s222 = smul.addr %s221, 8
        %s223 = scalar_lea.vmem %s2, %s222
        %p224 = pneg %p103
        %p225 = pneg %p100
        %p226 = pneg %p129
        %p227 = pneg %p126
        %p228 = pneg %p155
        %p229 = pneg %p152
        %p230 = scmp.lt.s32.totalorder %s22, 0
        %s231 = scalar_select %p230, %s22, 0
        %s232 = smul.addr %s231, 4
        %s233 = scalar_lea.vmem %s0, %s232
        %s234 = smul.u32 64, %s23
        %p235 = scmp.lt.s32.totalorder %s234, 255
        %s236 = scalar_select %p235, %s234, 255
        %s237 = smul.addr %s236, 4
        %s238 = scalar_lea.vmem %s1, %s237
        %s239 = smul.u32 64, %s23
        %s240 = smul.u32 64, %s23
        %p241 = scmp.lt.s32.totalorder %s240, 255
        %s242 = scalar_select %p241, %s240, 255
        %s243 = smul.addr %s242, 8
        %s244 = scalar_lea.vmem %s2, %s243
        %s245 = smul.u32 64, %s23
        %p246 = scmp.eq.s32.totalorder %s23, 0
        // Predicated region
        $region33: #{tpu_custom_call.1} parent=31 // pred_check
          %p247 = pneg %p246
        $region34: #{tpu_custom_call.1} parent=31 // pred_check_branch
          %249 = sbr.rel (%p247) target = $region36
        $region35: #{tpu_custom_call.1} parent=31 // pred_region
          %250 = vst [vmem:[#allocation2] sm:$0x1] -1e+30
          %251 = vst [vmem:[#allocation3] sm:$0x1] 0.0
          %252 = vst [vmem:[#allocation6] sm:$0x1] 0.0
        $region36: #{tpu_custom_call.1} parent=31 // pred_fallthru
          _
        %v253 = vld [vmem:[%s238] sm:$0xf]
        %v254 = vld [vmem:[%s238 + $0x4] sm:$0xf]
        %v255 = vld [vmem:[%s238 + $0x8] sm:$0xf]
        %v256 = vld [vmem:[%s238 + $0xc] sm:$0xf]
        %v257 = vld [vmem:[%s238 + $0x10] sm:$0xf]
        %v258 = vld [vmem:[%s238 + $0x14] sm:$0xf]
        %v259 = vld [vmem:[%s238 + $0x18] sm:$0xf]
        %v260 = vld [vmem:[%s238 + $0x1c] sm:$0xf]
        %v261 = vld [vmem:[%s238 + $0x20] sm:$0xf]
        %v262 = vld [vmem:[%s238 + $0x24] sm:$0xf]
        %v263 = vld [vmem:[%s238 + $0x28] sm:$0xf]
        %v264 = vld [vmem:[%s238 + $0x2c] sm:$0xf]
        %v265 = vld [vmem:[%s238 + $0x30] sm:$0xf]
        %v266 = vld [vmem:[%s238 + $0x34] sm:$0xf]
        %v267 = vld [vmem:[%s238 + $0x38] sm:$0xf]
        %v268 = vld [vmem:[%s238 + $0x3c] sm:$0xf]
        %v269 = vld [vmem:[%s238 + $0x40] sm:$0xf]
        %v270 = vld [vmem:[%s238 + $0x44] sm:$0xf]
        %v271 = vld [vmem:[%s238 + $0x48] sm:$0xf]
        %v272 = vld [vmem:[%s238 + $0x4c] sm:$0xf]
        %v273 = vld [vmem:[%s238 + $0x50] sm:$0xf]
        %v274 = vld [vmem:[%s238 + $0x54] sm:$0xf]
        %v275 = vld [vmem:[%s238 + $0x58] sm:$0xf]
        %v276 = vld [vmem:[%s238 + $0x5c] sm:$0xf]
        %v277 = vld [vmem:[%s238 + $0x60] sm:$0xf]
        %v278 = vld [vmem:[%s238 + $0x64] sm:$0xf]
        %v279 = vld [vmem:[%s238 + $0x68] sm:$0xf]
        %v280 = vld [vmem:[%s238 + $0x6c] sm:$0xf]
        %v281 = vld [vmem:[%s238 + $0x70] sm:$0xf]
        %v282 = vld [vmem:[%s238 + $0x74] sm:$0xf]
        %v283 = vld [vmem:[%s238 + $0x78] sm:$0xf]
        %v284 = vld [vmem:[%s238 + $0x7c] sm:$0xf]
        %v285 = vld [vmem:[%s238 + $0x80] sm:$0xf]
        %v286 = vld [vmem:[%s238 + $0x84] sm:$0xf]
        %v287 = vld [vmem:[%s238 + $0x88] sm:$0xf]
        %v288 = vld [vmem:[%s238 + $0x8c] sm:$0xf]
        %v289 = vld [vmem:[%s238 + $0x90] sm:$0xf]
        %v290 = vld [vmem:[%s238 + $0x94] sm:$0xf]
        %v291 = vld [vmem:[%s238 + $0x98] sm:$0xf]
        %v292 = vld [vmem:[%s238 + $0x9c] sm:$0xf]
        %v293 = vld [vmem:[%s238 + $0xa0] sm:$0xf]
        %v294 = vld [vmem:[%s238 + $0xa4] sm:$0xf]
        %v295 = vld [vmem:[%s238 + $0xa8] sm:$0xf]
        %v296 = vld [vmem:[%s238 + $0xac] sm:$0xf]
        %v297 = vld [vmem:[%s238 + $0xb0] sm:$0xf]
        %v298 = vld [vmem:[%s238 + $0xb4] sm:$0xf]
        %v299 = vld [vmem:[%s238 + $0xb8] sm:$0xf]
        %v300 = vld [vmem:[%s238 + $0xbc] sm:$0xf]
        %v301 = vld [vmem:[%s238 + $0xc0] sm:$0xf]
        %v302 = vld [vmem:[%s238 + $0xc4] sm:$0xf]
        %v303 = vld [vmem:[%s238 + $0xc8] sm:$0xf]
        %v304 = vld [vmem:[%s238 + $0xcc] sm:$0xf]
        %v305 = vld [vmem:[%s238 + $0xd0] sm:$0xf]
        %v306 = vld [vmem:[%s238 + $0xd4] sm:$0xf]
        %v307 = vld [vmem:[%s238 + $0xd8] sm:$0xf]
        %v308 = vld [vmem:[%s238 + $0xdc] sm:$0xf]
        %v309 = vld [vmem:[%s238 + $0xe0] sm:$0xf]
        %v310 = vld [vmem:[%s238 + $0xe4] sm:$0xf]
        %v311 = vld [vmem:[%s238 + $0xe8] sm:$0xf]
        %v312 = vld [vmem:[%s238 + $0xec] sm:$0xf]
        %v313 = vld [vmem:[%s238 + $0xf0] sm:$0xf]
        %v314 = vld [vmem:[%s238 + $0xf4] sm:$0xf]
        %v315 = vld [vmem:[%s238 + $0xf8] sm:$0xf]
        %v316 = vld [vmem:[%s238 + $0xfc] sm:$0xf]
        %v317 = vld [vmem:[%s233] sm:$0xf]
        %v318 = vld [vmem:[%s233 + $0x4] sm:$0xf]
        %v319 = vld [vmem:[%s233 + $0x8] sm:$0xf]
        %v320 = vld [vmem:[%s233 + $0xc] sm:$0xf]
        %v321 = vld [vmem:[%s233 + $0x10] sm:$0xf]
        %v322 = vld [vmem:[%s233 + $0x14] sm:$0xf]
        %v323 = vld [vmem:[%s233 + $0x18] sm:$0xf]
        %v324 = vld [vmem:[%s233 + $0x1c] sm:$0xf]
        %v325 = vld [vmem:[%s233 + $0x20] sm:$0xf]
        %v326 = vld [vmem:[%s233 + $0x24] sm:$0xf]
        %v327 = vld [vmem:[%s233 + $0x28] sm:$0xf]
        %v328 = vld [vmem:[%s233 + $0x2c] sm:$0xf]
        %v329 = vld [vmem:[%s233 + $0x30] sm:$0xf]
        %v330 = vld [vmem:[%s233 + $0x34] sm:$0xf]
        %v331 = vld [vmem:[%s233 + $0x38] sm:$0xf]
        %v332 = vld [vmem:[%s233 + $0x3c] sm:$0xf]
        %v333 = vld [vmem:[%s244] sm:$0xff]
        %v334 = vld [vmem:[%s244 + $0x8] sm:$0xff]
        %v335 = vld [vmem:[%s244 + $0x10] sm:$0xff]
        %v336 = vld [vmem:[%s244 + $0x18] sm:$0xff]
        %v337 = vld [vmem:[%s244 + $0x20] sm:$0xff]
        %v338 = vld [vmem:[%s244 + $0x28] sm:$0xff]
        %v339 = vld [vmem:[%s244 + $0x30] sm:$0xff]
        %v340 = vld [vmem:[%s244 + $0x38] sm:$0xff]
        %v341 = vld [vmem:[%s244 + $0x40] sm:$0xff]
        %v342 = vld [vmem:[%s244 + $0x48] sm:$0xff]
        %v343 = vld [vmem:[%s244 + $0x50] sm:$0xff]
        %v344 = vld [vmem:[%s244 + $0x58] sm:$0xff]
        %v345 = vld [vmem:[%s244 + $0x60] sm:$0xff]
        %v346 = vld [vmem:[%s244 + $0x68] sm:$0xff]
        %v347 = vld [vmem:[%s244 + $0x70] sm:$0xff]
        %v348 = vld [vmem:[%s244 + $0x78] sm:$0xff]
        %v349 = vld [vmem:[%s244 + $0x80] sm:$0xff]
        %v350 = vld [vmem:[%s244 + $0x88] sm:$0xff]
        %v351 = vld [vmem:[%s244 + $0x90] sm:$0xff]
        %v352 = vld [vmem:[%s244 + $0x98] sm:$0xff]
        %v353 = vld [vmem:[%s244 + $0xa0] sm:$0xff]
        %v354 = vld [vmem:[%s244 + $0xa8] sm:$0xff]
        %v355 = vld [vmem:[%s244 + $0xb0] sm:$0xff]
        %v356 = vld [vmem:[%s244 + $0xb8] sm:$0xff]
        %v357 = vld [vmem:[%s244 + $0xc0] sm:$0xff]
        %v358 = vld [vmem:[%s244 + $0xc8] sm:$0xff]
        %v359 = vld [vmem:[%s244 + $0xd0] sm:$0xff]
        %v360 = vld [vmem:[%s244 + $0xd8] sm:$0xff]
        %v361 = vld [vmem:[%s244 + $0xe0] sm:$0xff]
        %v362 = vld [vmem:[%s244 + $0xe8] sm:$0xff]
        %v363 = vld [vmem:[%s244 + $0xf0] sm:$0xff]
        %v364 = vld [vmem:[%s244 + $0xf8] sm:$0xff]
        %v365 = vld [vmem:[%s244 + $0x100] sm:$0xff]
        %v366 = vld [vmem:[%s244 + $0x108] sm:$0xff]
        %v367 = vld [vmem:[%s244 + $0x110] sm:$0xff]
        %v368 = vld [vmem:[%s244 + $0x118] sm:$0xff]
        %v369 = vld [vmem:[%s244 + $0x120] sm:$0xff]
        %v370 = vld [vmem:[%s244 + $0x128] sm:$0xff]
        %v371 = vld [vmem:[%s244 + $0x130] sm:$0xff]
        %v372 = vld [vmem:[%s244 + $0x138] sm:$0xff]
        %v373 = vld [vmem:[%s244 + $0x140] sm:$0xff]
        %v374 = vld [vmem:[%s244 + $0x148] sm:$0xff]
        %v375 = vld [vmem:[%s244 + $0x150] sm:$0xff]
        %v376 = vld [vmem:[%s244 + $0x158] sm:$0xff]
        %v377 = vld [vmem:[%s244 + $0x160] sm:$0xff]
        %v378 = vld [vmem:[%s244 + $0x168] sm:$0xff]
        %v379 = vld [vmem:[%s244 + $0x170] sm:$0xff]
        %v380 = vld [vmem:[%s244 + $0x178] sm:$0xff]
        %v381 = vld [vmem:[%s244 + $0x180] sm:$0xff]
        %v382 = vld [vmem:[%s244 + $0x188] sm:$0xff]
        %v383 = vld [vmem:[%s244 + $0x190] sm:$0xff]
        %v384 = vld [vmem:[%s244 + $0x198] sm:$0xff]
        %v385 = vld [vmem:[%s244 + $0x1a0] sm:$0xff]
        %v386 = vld [vmem:[%s244 + $0x1a8] sm:$0xff]
        %v387 = vld [vmem:[%s244 + $0x1b0] sm:$0xff]
        %v388 = vld [vmem:[%s244 + $0x1b8] sm:$0xff]
        %v389 = vld [vmem:[%s244 + $0x1c0] sm:$0xff]
        %v390 = vld [vmem:[%s244 + $0x1c8] sm:$0xff]
        %v391 = vld [vmem:[%s244 + $0x1d0] sm:$0xff]
        %v392 = vld [vmem:[%s244 + $0x1d8] sm:$0xff]
        %v393 = vld [vmem:[%s244 + $0x1e0] sm:$0xff]
        %v394 = vld [vmem:[%s244 + $0x1e8] sm:$0xff]
        %v395 = vld [vmem:[%s244 + $0x1f0] sm:$0xff]
        %v396 = vld [vmem:[%s244 + $0x1f8] sm:$0xff]
        %398 = vset.pattern.permute.xlu0 0
        %399 = vperm.xlu0 %398, %v333
        %v400 = vpop.permute.xlu0 %399
        %403 = vset.pattern.permute.xlu0 0
        %404 = vperm.xlu0 %403, %v334
        %v405 = vpop.permute.xlu0 %404
        %408 = vset.pattern.permute.xlu0 0
        %409 = vperm.xlu0 %408, %v335
        %v410 = vpop.permute.xlu0 %409
        %413 = vset.pattern.permute.xlu0 0
        %414 = vperm.xlu0 %413, %v336
        %v415 = vpop.permute.xlu0 %414
        %418 = vset.pattern.permute.xlu0 0
        %419 = vperm.xlu0 %418, %v337
        %v420 = vpop.permute.xlu0 %419
        %423 = vset.pattern.permute.xlu0 0
        %424 = vperm.xlu0 %423, %v338
        %v425 = vpop.permute.xlu0 %424
        %428 = vset.pattern.permute.xlu0 0
        %429 = vperm.xlu0 %428, %v339
        %v430 = vpop.permute.xlu0 %429
        %433 = vset.pattern.permute.xlu0 0
        %434 = vperm.xlu0 %433, %v340
        %v435 = vpop.permute.xlu0 %434
        %438 = vset.pattern.permute.xlu0 0
        %439 = vperm.xlu0 %438, %v341
        %v440 = vpop.permute.xlu0 %439
        %443 = vset.pattern.permute.xlu0 0
        %444 = vperm.xlu0 %443, %v342
        %v445 = vpop.permute.xlu0 %444
        %448 = vset.pattern.permute.xlu0 0
        %449 = vperm.xlu0 %448, %v343
        %v450 = vpop.permute.xlu0 %449
        %453 = vset.pattern.permute.xlu0 0
        %454 = vperm.xlu0 %453, %v344
        %v455 = vpop.permute.xlu0 %454
        %458 = vset.pattern.permute.xlu0 0
        %459 = vperm.xlu0 %458, %v345
        %v460 = vpop.permute.xlu0 %459
        %463 = vset.pattern.permute.xlu0 0
        %464 = vperm.xlu0 %463, %v346
        %v465 = vpop.permute.xlu0 %464
        %468 = vset.pattern.permute.xlu0 0
        %469 = vperm.xlu0 %468, %v347
        %v470 = vpop.permute.xlu0 %469
        %473 = vset.pattern.permute.xlu0 0
        %474 = vperm.xlu0 %473, %v348
        %v475 = vpop.permute.xlu0 %474
        %478 = vset.pattern.permute.xlu0 0
        %479 = vperm.xlu0 %478, %v349
        %v480 = vpop.permute.xlu0 %479
        %483 = vset.pattern.permute.xlu0 0
        %484 = vperm.xlu0 %483, %v350
        %v485 = vpop.permute.xlu0 %484
        %488 = vset.pattern.permute.xlu0 0
        %489 = vperm.xlu0 %488, %v351
        %v490 = vpop.permute.xlu0 %489
        %493 = vset.pattern.permute.xlu0 0
        %494 = vperm.xlu0 %493, %v352
        %v495 = vpop.permute.xlu0 %494
        %498 = vset.pattern.permute.xlu0 0
        %499 = vperm.xlu0 %498, %v353
        %v500 = vpop.permute.xlu0 %499
        %503 = vset.pattern.permute.xlu0 0
        %504 = vperm.xlu0 %503, %v354
        %v505 = vpop.permute.xlu0 %504
        %508 = vset.pattern.permute.xlu0 0
        %509 = vperm.xlu0 %508, %v355
        %v510 = vpop.permute.xlu0 %509
        %513 = vset.pattern.permute.xlu0 0
        %514 = vperm.xlu0 %513, %v356
        %v515 = vpop.permute.xlu0 %514
        %518 = vset.pattern.permute.xlu0 0
        %519 = vperm.xlu0 %518, %v357
        %v520 = vpop.permute.xlu0 %519
        %523 = vset.pattern.permute.xlu0 0
        %524 = vperm.xlu0 %523, %v358
        %v525 = vpop.permute.xlu0 %524
        %528 = vset.pattern.permute.xlu0 0
        %529 = vperm.xlu0 %528, %v359
        %v530 = vpop.permute.xlu0 %529
        %533 = vset.pattern.permute.xlu0 0
        %534 = vperm.xlu0 %533, %v360
        %v535 = vpop.permute.xlu0 %534
        %538 = vset.pattern.permute.xlu0 0
        %539 = vperm.xlu0 %538, %v361
        %v540 = vpop.permute.xlu0 %539
        %543 = vset.pattern.permute.xlu0 0
        %544 = vperm.xlu0 %543, %v362
        %v545 = vpop.permute.xlu0 %544
        %548 = vset.pattern.permute.xlu0 0
        %549 = vperm.xlu0 %548, %v363
        %v550 = vpop.permute.xlu0 %549
        %553 = vset.pattern.permute.xlu0 0
        %554 = vperm.xlu0 %553, %v364
        %v555 = vpop.permute.xlu0 %554
        %558 = vset.pattern.permute.xlu0 0
        %559 = vperm.xlu0 %558, %v365
        %v560 = vpop.permute.xlu0 %559
        %563 = vset.pattern.permute.xlu0 0
        %564 = vperm.xlu0 %563, %v366
        %v565 = vpop.permute.xlu0 %564
        %568 = vset.pattern.permute.xlu0 0
        %569 = vperm.xlu0 %568, %v367
        %v570 = vpop.permute.xlu0 %569
        %573 = vset.pattern.permute.xlu0 0
        %574 = vperm.xlu0 %573, %v368
        %v575 = vpop.permute.xlu0 %574
        %578 = vset.pattern.permute.xlu0 0
        %579 = vperm.xlu0 %578, %v369
        %v580 = vpop.permute.xlu0 %579
        %583 = vset.pattern.permute.xlu0 0
        %584 = vperm.xlu0 %583, %v370
        %v585 = vpop.permute.xlu0 %584
        %588 = vset.pattern.permute.xlu0 0
        %589 = vperm.xlu0 %588, %v371
        %v590 = vpop.permute.xlu0 %589
        %593 = vset.pattern.permute.xlu0 0
        %594 = vperm.xlu0 %593, %v372
        %v595 = vpop.permute.xlu0 %594
        %598 = vset.pattern.permute.xlu0 0
        %599 = vperm.xlu0 %598, %v373
        %v600 = vpop.permute.xlu0 %599
        %603 = vset.pattern.permute.xlu0 0
        %604 = vperm.xlu0 %603, %v374
        %v605 = vpop.permute.xlu0 %604
        %608 = vset.pattern.permute.xlu0 0
        %609 = vperm.xlu0 %608, %v375
        %v610 = vpop.permute.xlu0 %609
        %613 = vset.pattern.permute.xlu0 0
        %614 = vperm.xlu0 %613, %v376
        %v615 = vpop.permute.xlu0 %614
        %618 = vset.pattern.permute.xlu0 0
        %619 = vperm.xlu0 %618, %v377
        %v620 = vpop.permute.xlu0 %619
        %623 = vset.pattern.permute.xlu0 0
        %624 = vperm.xlu0 %623, %v378
        %v625 = vpop.permute.xlu0 %624
        %628 = vset.pattern.permute.xlu0 0
        %629 = vperm.xlu0 %628, %v379
        %v630 = vpop.permute.xlu0 %629
        %633 = vset.pattern.permute.xlu0 0
        %634 = vperm.xlu0 %633, %v380
        %v635 = vpop.permute.xlu0 %634
        %638 = vset.pattern.permute.xlu0 0
        %639 = vperm.xlu0 %638, %v381
        %v640 = vpop.permute.xlu0 %639
        %643 = vset.pattern.permute.xlu0 0
        %644 = vperm.xlu0 %643, %v382
        %v645 = vpop.permute.xlu0 %644
        %648 = vset.pattern.permute.xlu0 0
        %649 = vperm.xlu0 %648, %v383
        %v650 = vpop.permute.xlu0 %649
        %653 = vset.pattern.permute.xlu0 0
        %654 = vperm.xlu0 %653, %v384
        %v655 = vpop.permute.xlu0 %654
        %658 = vset.pattern.permute.xlu0 0
        %659 = vperm.xlu0 %658, %v385
        %v660 = vpop.permute.xlu0 %659
        %663 = vset.pattern.permute.xlu0 0
        %664 = vperm.xlu0 %663, %v386
        %v665 = vpop.permute.xlu0 %664
        %668 = vset.pattern.permute.xlu0 0
        %669 = vperm.xlu0 %668, %v387
        %v670 = vpop.permute.xlu0 %669
        %673 = vset.pattern.permute.xlu0 0
        %674 = vperm.xlu0 %673, %v388
        %v675 = vpop.permute.xlu0 %674
        %678 = vset.pattern.permute.xlu0 0
        %679 = vperm.xlu0 %678, %v389
        %v680 = vpop.permute.xlu0 %679
        %683 = vset.pattern.permute.xlu0 0
        %684 = vperm.xlu0 %683, %v390
        %v685 = vpop.permute.xlu0 %684
        %688 = vset.pattern.permute.xlu0 0
        %689 = vperm.xlu0 %688, %v391
        %v690 = vpop.permute.xlu0 %689
        %693 = vset.pattern.permute.xlu0 0
        %694 = vperm.xlu0 %693, %v392
        %v695 = vpop.permute.xlu0 %694
        %698 = vset.pattern.permute.xlu0 0
        %699 = vperm.xlu0 %698, %v393
        %v700 = vpop.permute.xlu0 %699
        %703 = vset.pattern.permute.xlu0 0
        %704 = vperm.xlu0 %703, %v394
        %v705 = vpop.permute.xlu0 %704
        %708 = vset.pattern.permute.xlu0 0
        %709 = vperm.xlu0 %708, %v395
        %v710 = vpop.permute.xlu0 %709
        %713 = vset.pattern.permute.xlu0 0
        %714 = vperm.xlu0 %713, %v396
        %v715 = vpop.permute.xlu0 %714
        %v781 = vunpack.c.l.b16 %v253
        %v782 = vunpack.c.l.b16 %v254
        %v783 = vunpack.c.l.b16 %v255
        %v784 = vunpack.c.l.b16 %v256
        %v785 = vunpack.c.l.b16 %v257
        %v786 = vunpack.c.l.b16 %v258
        %v787 = vunpack.c.l.b16 %v259
        %v788 = vunpack.c.l.b16 %v260
        %v789 = vunpack.c.l.b16 %v261
        %v790 = vunpack.c.l.b16 %v262
        %v791 = vunpack.c.l.b16 %v263
        %v792 = vunpack.c.l.b16 %v264
        %v793 = vunpack.c.l.b16 %v265
        %v794 = vunpack.c.l.b16 %v266
        %v795 = vunpack.c.l.b16 %v267
        %v796 = vunpack.c.l.b16 %v268
        %v797 = vunpack.c.l.b16 %v269
        %v798 = vunpack.c.l.b16 %v270
        %v799 = vunpack.c.l.b16 %v271
        %v800 = vunpack.c.l.b16 %v272
        %v801 = vunpack.c.l.b16 %v273
        %v802 = vunpack.c.l.b16 %v274
        %v803 = vunpack.c.l.b16 %v275
        %v804 = vunpack.c.l.b16 %v276
        %v805 = vunpack.c.l.b16 %v277
        %v806 = vunpack.c.l.b16 %v278
        %v807 = vunpack.c.l.b16 %v279
        %v808 = vunpack.c.l.b16 %v280
        %v809 = vunpack.c.l.b16 %v281
        %v810 = vunpack.c.l.b16 %v282
        %v811 = vunpack.c.l.b16 %v283
        %v812 = vunpack.c.l.b16 %v284
        %v813 = vunpack.c.l.b16 %v285
        %v814 = vunpack.c.l.b16 %v286
        %v815 = vunpack.c.l.b16 %v287
        %v816 = vunpack.c.l.b16 %v288
        %v817 = vunpack.c.l.b16 %v289
        %v818 = vunpack.c.l.b16 %v290
        %v819 = vunpack.c.l.b16 %v291
        %v820 = vunpack.c.l.b16 %v292
        %v821 = vunpack.c.l.b16 %v293
        %v822 = vunpack.c.l.b16 %v294
        %v823 = vunpack.c.l.b16 %v295
        %v824 = vunpack.c.l.b16 %v296
        %v825 = vunpack.c.l.b16 %v297
        %v826 = vunpack.c.l.b16 %v298
        %v827 = vunpack.c.l.b16 %v299
        %v828 = vunpack.c.l.b16 %v300
        %v829 = vunpack.c.l.b16 %v301
        %v830 = vunpack.c.l.b16 %v302
        %v831 = vunpack.c.l.b16 %v303
        %v832 = vunpack.c.l.b16 %v304
        %v833 = vunpack.c.l.b16 %v305
        %v834 = vunpack.c.l.b16 %v306
        %v835 = vunpack.c.l.b16 %v307
        %v836 = vunpack.c.l.b16 %v308
        %v837 = vunpack.c.l.b16 %v309
        %v838 = vunpack.c.l.b16 %v310
        %v839 = vunpack.c.l.b16 %v311
        %v840 = vunpack.c.l.b16 %v312
        %v841 = vunpack.c.l.b16 %v313
        %v842 = vunpack.c.l.b16 %v314
        %v843 = vunpack.c.l.b16 %v315
        %v844 = vunpack.c.l.b16 %v316
        %v845 = vpack.c.b16 %v782, %v781
        %v846 = vpack.c.b16 %v784, %v783
        %v847 = vpack.c.b16 %v786, %v785
        %v848 = vpack.c.b16 %v788, %v787
        %v849 = vpack.c.b16 %v790, %v789
        %v850 = vpack.c.b16 %v792, %v791
        %v851 = vpack.c.b16 %v794, %v793
        %v852 = vpack.c.b16 %v796, %v795
        %v853 = vpack.c.b16 %v798, %v797
        %v854 = vpack.c.b16 %v800, %v799
        %v855 = vpack.c.b16 %v802, %v801
        %v856 = vpack.c.b16 %v804, %v803
        %v857 = vpack.c.b16 %v806, %v805
        %v858 = vpack.c.b16 %v808, %v807
        %v859 = vpack.c.b16 %v810, %v809
        %v860 = vpack.c.b16 %v812, %v811
        %v861 = vpack.c.b16 %v814, %v813
        %v862 = vpack.c.b16 %v816, %v815
        %v863 = vpack.c.b16 %v818, %v817
        %v864 = vpack.c.b16 %v820, %v819
        %v865 = vpack.c.b16 %v822, %v821
        %v866 = vpack.c.b16 %v824, %v823
        %v867 = vpack.c.b16 %v826, %v825
        %v868 = vpack.c.b16 %v828, %v827
        %v869 = vpack.c.b16 %v830, %v829
        %v870 = vpack.c.b16 %v832, %v831
        %v871 = vpack.c.b16 %v834, %v833
        %v872 = vpack.c.b16 %v836, %v835
        %v873 = vpack.c.b16 %v838, %v837
        %v874 = vpack.c.b16 %v840, %v839
        %v875 = vpack.c.b16 %v842, %v841
        %v876 = vpack.c.b16 %v844, %v843
        %v925 = vunpack.c.l.b16 %v317
        %v926 = vunpack.c.l.b16 %v318
        %v927 = vunpack.c.l.b16 %v319
        %v928 = vunpack.c.l.b16 %v320
        %v929 = vunpack.c.l.b16 %v321
        %v930 = vunpack.c.l.b16 %v322
        %v931 = vunpack.c.l.b16 %v323
        %v932 = vunpack.c.l.b16 %v324
        %v933 = vunpack.c.l.b16 %v325
        %v934 = vunpack.c.l.b16 %v326
        %v935 = vunpack.c.l.b16 %v327
        %v936 = vunpack.c.l.b16 %v328
        %v937 = vunpack.c.l.b16 %v329
        %v938 = vunpack.c.l.b16 %v330
        %v939 = vunpack.c.l.b16 %v331
        %v940 = vunpack.c.l.b16 %v332
        %v941 = vpack.c.b16 %v926, %v925
        %v942 = vpack.c.b16 %v928, %v927
        %v943 = vpack.c.b16 %v930, %v929
        %v944 = vpack.c.b16 %v932, %v931
        %v945 = vpack.c.b16 %v934, %v933
        %v946 = vpack.c.b16 %v936, %v935
        %v947 = vpack.c.b16 %v938, %v937
        %v948 = vpack.c.b16 %v940, %v939
        %957 = vmatpush.bf16.msra.mxu0 %v948
        %958 = vmatpush.bf16.msra.mxu0 %v947
        %959 = vmatpush.bf16.msra.mxu0 %v946
        %960 = vmatpush.bf16.msra.mxu0 %v945
        %961 = vmatpush.bf16.msra.mxu0 %v944
        %962 = vmatpush.bf16.msra.mxu0 %v943
        %963 = vmatpush.bf16.msra.mxu0 %v942
        %964 = vmatpush.bf16.msra.mxu0 %v941
        %965 = vmatmul.bf16.gmra.mxu0 %v845
        %v966 = vpop.f32.mrf.mxu0
        %v967 = vadd.f32 %v400, %v966
        %v968 = vpop.f32.mrf.mxu0
        %v969 = vadd.f32 %v405, %v968
        %970 = vmatmul.bf16.gmra.mxu0 %v846
        %v971 = vpop.f32.mrf.mxu0
        %v972 = vadd.f32 %v410, %v971
        %v973 = vpop.f32.mrf.mxu0
        %v974 = vadd.f32 %v415, %v973
        %975 = vmatmul.bf16.gmra.mxu0 %v847
        %v976 = vpop.f32.mrf.mxu0
        %v977 = vadd.f32 %v420, %v976
        %v978 = vpop.f32.mrf.mxu0
        %v979 = vadd.f32 %v425, %v978
        %980 = vmatmul.bf16.gmra.mxu0 %v848
        %v981 = vpop.f32.mrf.mxu0
        %v982 = vadd.f32 %v430, %v981
        %v983 = vpop.f32.mrf.mxu0
        %v984 = vadd.f32 %v435, %v983
        %985 = vmatmul.bf16.gmra.mxu0 %v849
        %v986 = vpop.f32.mrf.mxu0
        %v987 = vadd.f32 %v440, %v986
        %v988 = vpop.f32.mrf.mxu0
        %v989 = vadd.f32 %v445, %v988
        %990 = vmatmul.bf16.gmra.mxu0 %v850
        %v991 = vpop.f32.mrf.mxu0
        %v992 = vadd.f32 %v450, %v991
        %v993 = vpop.f32.mrf.mxu0
        %v994 = vadd.f32 %v455, %v993
        %995 = vmatmul.bf16.gmra.mxu0 %v851
        %v996 = vpop.f32.mrf.mxu0
        %v997 = vadd.f32 %v460, %v996
        %v998 = vpop.f32.mrf.mxu0
        %v999 = vadd.f32 %v465, %v998
        %1000 = vmatmul.bf16.gmra.mxu0 %v852
        %v1001 = vpop.f32.mrf.mxu0
        %v1002 = vadd.f32 %v470, %v1001
        %v1003 = vpop.f32.mrf.mxu0
        %v1004 = vadd.f32 %v475, %v1003
        %1005 = vmatmul.bf16.gmra.mxu0 %v853
        %v1006 = vpop.f32.mrf.mxu0
        %v1007 = vadd.f32 %v480, %v1006
        %v1008 = vpop.f32.mrf.mxu0
        %v1009 = vadd.f32 %v485, %v1008
        %1010 = vmatmul.bf16.gmra.mxu0 %v854
        %v1011 = vpop.f32.mrf.mxu0
        %v1012 = vadd.f32 %v490, %v1011
        %v1013 = vpop.f32.mrf.mxu0
        %v1014 = vadd.f32 %v495, %v1013
        %1015 = vmatmul.bf16.gmra.mxu0 %v855
        %v1016 = vpop.f32.mrf.mxu0
        %v1017 = vadd.f32 %v500, %v1016
        %v1018 = vpop.f32.mrf.mxu0
        %v1019 = vadd.f32 %v505, %v1018
        %1020 = vmatmul.bf16.gmra.mxu0 %v856
        %v1021 = vpop.f32.mrf.mxu0
        %v1022 = vadd.f32 %v510, %v1021
        %v1023 = vpop.f32.mrf.mxu0
        %v1024 = vadd.f32 %v515, %v1023
        %1025 = vmatmul.bf16.gmra.mxu0 %v857
        %v1026 = vpop.f32.mrf.mxu0
        %v1027 = vadd.f32 %v520, %v1026
        %v1028 = vpop.f32.mrf.mxu0
        %v1029 = vadd.f32 %v525, %v1028
        %1030 = vmatmul.bf16.gmra.mxu0 %v858
        %v1031 = vpop.f32.mrf.mxu0
        %v1032 = vadd.f32 %v530, %v1031
        %v1033 = vpop.f32.mrf.mxu0
        %v1034 = vadd.f32 %v535, %v1033
        %1035 = vmatmul.bf16.gmra.mxu0 %v859
        %v1036 = vpop.f32.mrf.mxu0
        %v1037 = vadd.f32 %v540, %v1036
        %v1038 = vpop.f32.mrf.mxu0
        %v1039 = vadd.f32 %v545, %v1038
        %1040 = vmatmul.bf16.gmra.mxu0 %v860
        %v1041 = vpop.f32.mrf.mxu0
        %v1042 = vadd.f32 %v550, %v1041
        %v1043 = vpop.f32.mrf.mxu0
        %v1044 = vadd.f32 %v555, %v1043
        %1045 = vmatmul.bf16.gmra.mxu0 %v861
        %v1046 = vpop.f32.mrf.mxu0
        %v1047 = vadd.f32 %v560, %v1046
        %v1048 = vpop.f32.mrf.mxu0
        %v1049 = vadd.f32 %v565, %v1048
        %1050 = vmatmul.bf16.gmra.mxu0 %v862
        %v1051 = vpop.f32.mrf.mxu0
        %v1052 = vadd.f32 %v570, %v1051
        %v1053 = vpop.f32.mrf.mxu0
        %v1054 = vadd.f32 %v575, %v1053
        %1055 = vmatmul.bf16.gmra.mxu0 %v863
        %v1056 = vpop.f32.mrf.mxu0
        %v1057 = vadd.f32 %v580, %v1056
        %v1058 = vpop.f32.mrf.mxu0
        %v1059 = vadd.f32 %v585, %v1058
        %1060 = vmatmul.bf16.gmra.mxu0 %v864
        %v1061 = vpop.f32.mrf.mxu0
        %v1062 = vadd.f32 %v590, %v1061
        %v1063 = vpop.f32.mrf.mxu0
        %v1064 = vadd.f32 %v595, %v1063
        %1065 = vmatmul.bf16.gmra.mxu0 %v865
        %v1066 = vpop.f32.mrf.mxu0
        %v1067 = vadd.f32 %v600, %v1066
        %v1068 = vpop.f32.mrf.mxu0
        %v1069 = vadd.f32 %v605, %v1068
        %1070 = vmatmul.bf16.gmra.mxu0 %v866
        %v1071 = vpop.f32.mrf.mxu0
        %v1072 = vadd.f32 %v610, %v1071
        %v1073 = vpop.f32.mrf.mxu0
        %v1074 = vadd.f32 %v615, %v1073
        %1075 = vmatmul.bf16.gmra.mxu0 %v867
        %v1076 = vpop.f32.mrf.mxu0
        %v1077 = vadd.f32 %v620, %v1076
        %v1078 = vpop.f32.mrf.mxu0
        %v1079 = vadd.f32 %v625, %v1078
        %1080 = vmatmul.bf16.gmra.mxu0 %v868
        %v1081 = vpop.f32.mrf.mxu0
        %v1082 = vadd.f32 %v630, %v1081
        %v1083 = vpop.f32.mrf.mxu0
        %v1084 = vadd.f32 %v635, %v1083
        %1085 = vmatmul.bf16.gmra.mxu0 %v869
        %v1086 = vpop.f32.mrf.mxu0
        %v1087 = vadd.f32 %v640, %v1086
        %v1088 = vpop.f32.mrf.mxu0
        %v1089 = vadd.f32 %v645, %v1088
        %1090 = vmatmul.bf16.gmra.mxu0 %v870
        %v1091 = vpop.f32.mrf.mxu0
        %v1092 = vadd.f32 %v650, %v1091
        %v1093 = vpop.f32.mrf.mxu0
        %v1094 = vadd.f32 %v655, %v1093
        %1095 = vmatmul.bf16.gmra.mxu0 %v871
        %v1096 = vpop.f32.mrf.mxu0
        %v1097 = vadd.f32 %v660, %v1096
        %v1098 = vpop.f32.mrf.mxu0
        %v1099 = vadd.f32 %v665, %v1098
        %1100 = vmatmul.bf16.gmra.mxu0 %v872
        %v1101 = vpop.f32.mrf.mxu0
        %v1102 = vadd.f32 %v670, %v1101
        %v1103 = vpop.f32.mrf.mxu0
        %v1104 = vadd.f32 %v675, %v1103
        %1105 = vmatmul.bf16.gmra.mxu0 %v873
        %v1106 = vpop.f32.mrf.mxu0
        %v1107 = vadd.f32 %v680, %v1106
        %v1108 = vpop.f32.mrf.mxu0
        %v1109 = vadd.f32 %v685, %v1108
        %1110 = vmatmul.bf16.gmra.mxu0 %v874
        %v1111 = vpop.f32.mrf.mxu0
        %v1112 = vadd.f32 %v690, %v1111
        %v1113 = vpop.f32.mrf.mxu0
        %v1114 = vadd.f32 %v695, %v1113
        %1115 = vmatmul.bf16.gmra.mxu0 %v875
        %v1116 = vpop.f32.mrf.mxu0
        %v1117 = vadd.f32 %v700, %v1116
        %v1118 = vpop.f32.mrf.mxu0
        %v1119 = vadd.f32 %v705, %v1118
        %1120 = vmatmul.bf16.gmra.mxu0 %v876
        %v1121 = vpop.f32.mrf.mxu0
        %v1122 = vadd.f32 %v710, %v1121
        %v1123 = vpop.f32.mrf.mxu0
        %v1124 = vadd.f32 %v715, %v1123
        %1125 = vdwg.mxu0
        %v1126 = vld [vmem:[#allocation6] sm:$0x1]
        %v1127 = vadd.f32 %v967, %v969
        %v1128 = vadd.f32 %v1127, %v972
        %v1129 = vadd.f32 %v1128, %v974
        %v1130 = vadd.f32 %v1129, %v977
        %v1131 = vadd.f32 %v1130, %v979
        %v1132 = vadd.f32 %v1131, %v982
        %v1133 = vadd.f32 %v1132, %v984
        %v1134 = vadd.f32 %v1133, %v987
        %v1135 = vadd.f32 %v1134, %v989
        %v1136 = vadd.f32 %v1135, %v992
        %v1137 = vadd.f32 %v1136, %v994
        %v1138 = vadd.f32 %v1137, %v997
        %v1139 = vadd.f32 %v1138, %v999
        %v1140 = vadd.f32 %v1139, %v1002
        %v1141 = vadd.f32 %v1140, %v1004
        %v1142 = vadd.f32 %v1141, %v1007
        %v1143 = vadd.f32 %v1142, %v1009
        %v1144 = vadd.f32 %v1143, %v1012
        %v1145 = vadd.f32 %v1144, %v1014
        %v1146 = vadd.f32 %v1145, %v1017
        %v1147 = vadd.f32 %v1146, %v1019
        %v1148 = vadd.f32 %v1147, %v1022
        %v1149 = vadd.f32 %v1148, %v1024
        %v1150 = vadd.f32 %v1149, %v1027
        %v1151 = vadd.f32 %v1150, %v1029
        %v1152 = vadd.f32 %v1151, %v1032
        %v1153 = vadd.f32 %v1152, %v1034
        %v1154 = vadd.f32 %v1153, %v1037
        %v1155 = vadd.f32 %v1154, %v1039
        %v1156 = vadd.f32 %v1155, %v1042
        %v1157 = vadd.f32 %v1156, %v1044
        %v1158 = vadd.f32 %v1157, %v1047
        %v1159 = vadd.f32 %v1158, %v1049
        %v1160 = vadd.f32 %v1159, %v1052
        %v1161 = vadd.f32 %v1160, %v1054
        %v1162 = vadd.f32 %v1161, %v1057
        %v1163 = vadd.f32 %v1162, %v1059
        %v1164 = vadd.f32 %v1163, %v1062
        %v1165 = vadd.f32 %v1164, %v1064
        %v1166 = vadd.f32 %v1165, %v1067
        %v1167 = vadd.f32 %v1166, %v1069
        %v1168 = vadd.f32 %v1167, %v1072
        %v1169 = vadd.f32 %v1168, %v1074
        %v1170 = vadd.f32 %v1169, %v1077
        %v1171 = vadd.f32 %v1170, %v1079
        %v1172 = vadd.f32 %v1171, %v1082
        %v1173 = vadd.f32 %v1172, %v1084
        %v1174 = vadd.f32 %v1173, %v1087
        %v1175 = vadd.f32 %v1174, %v1089
        %v1176 = vadd.f32 %v1175, %v1092
        %v1177 = vadd.f32 %v1176, %v1094
        %v1178 = vadd.f32 %v1177, %v1097
        %v1179 = vadd.f32 %v1178, %v1099
        %v1180 = vadd.f32 %v1179, %v1102
        %v1181 = vadd.f32 %v1180, %v1104
        %v1182 = vadd.f32 %v1181, %v1107
        %v1183 = vadd.f32 %v1182, %v1109
        %v1184 = vadd.f32 %v1183, %v1112
        %v1185 = vadd.f32 %v1184, %v1114
        %v1186 = vadd.f32 %v1185, %v1117
        %v1187 = vadd.f32 %v1186, %v1119
        %v1188 = vadd.f32 %v1187, %v1122
        %v1189 = vadd.f32 %v1188, %v1124
        %v1190 = vrot.slane %v1189, 4
        %v1191 = vadd.f32 %v1189, %v1190
        %v1192 = vrot.slane %v1191, 2
        %v1193 = vadd.f32 %v1191, %v1192
        %v1194 = vrot.slane %v1193, 1
        %v1195 = vadd.f32 %v1193, %v1194
        %v1196 = vadd.f32 %v1126, %v1195
        %1197 = vst [vmem:[#allocation6] sm:$0x1] %v1196
        %v1198 = vld [vmem:[#allocation2] sm:$0x1]
        %v1199 = vmax.f32 %v967, %v977
        %v1200 = vmax.f32 %v969, %v979
        %v1201 = vmax.f32 %v972, %v982
        %v1202 = vmax.f32 %v974, %v984
        %v1203 = vmax.f32 %v1199, %v987
        %v1204 = vmax.f32 %v1200, %v989
        %v1205 = vmax.f32 %v1201, %v992
        %v1206 = vmax.f32 %v1202, %v994
        %v1207 = vmax.f32 %v1203, %v997
        %v1208 = vmax.f32 %v1204, %v999
        %v1209 = vmax.f32 %v1205, %v1002
        %v1210 = vmax.f32 %v1206, %v1004
        %v1211 = vmax.f32 %v1207, %v1007
        %v1212 = vmax.f32 %v1208, %v1009
        %v1213 = vmax.f32 %v1209, %v1012
        %v1214 = vmax.f32 %v1210, %v1014
        %v1215 = vmax.f32 %v1211, %v1017
        %v1216 = vmax.f32 %v1212, %v1019
        %v1217 = vmax.f32 %v1213, %v1022
        %v1218 = vmax.f32 %v1214, %v1024
        %v1219 = vmax.f32 %v1215, %v1027
        %v1220 = vmax.f32 %v1216, %v1029
        %v1221 = vmax.f32 %v1217, %v1032
        %v1222 = vmax.f32 %v1218, %v1034
        %v1223 = vmax.f32 %v1219, %v1037
        %v1224 = vmax.f32 %v1220, %v1039
        %v1225 = vmax.f32 %v1221, %v1042
        %v1226 = vmax.f32 %v1222, %v1044
        %v1227 = vmax.f32 %v1223, %v1047
        %v1228 = vmax.f32 %v1224, %v1049
        %v1229 = vmax.f32 %v1225, %v1052
        %v1230 = vmax.f32 %v1226, %v1054
        %v1231 = vmax.f32 %v1227, %v1057
        %v1232 = vmax.f32 %v1228, %v1059
        %v1233 = vmax.f32 %v1229, %v1062
        %v1234 = vmax.f32 %v1230, %v1064
        %v1235 = vmax.f32 %v1231, %v1067
        %v1236 = vmax.f32 %v1232, %v1069
        %v1237 = vmax.f32 %v1233, %v1072
        %v1238 = vmax.f32 %v1234, %v1074
        %v1239 = vmax.f32 %v1235, %v1077
        %v1240 = vmax.f32 %v1236, %v1079
        %v1241 = vmax.f32 %v1237, %v1082
        %v1242 = vmax.f32 %v1238, %v1084
        %v1243 = vmax.f32 %v1239, %v1087
        %v1244 = vmax.f32 %v1240, %v1089
        %v1245 = vmax.f32 %v1241, %v1092
        %v1246 = vmax.f32 %v1242, %v1094
        %v1247 = vmax.f32 %v1243, %v1097
        %v1248 = vmax.f32 %v1244, %v1099
        %v1249 = vmax.f32 %v1245, %v1102
        %v1250 = vmax.f32 %v1246, %v1104
        %v1251 = vmax.f32 %v1247, %v1107
        %v1252 = vmax.f32 %v1248, %v1109
        %v1253 = vmax.f32 %v1249, %v1112
        %v1254 = vmax.f32 %v1250, %v1114
        %v1255 = vmax.f32 %v1251, %v1117
        %v1256 = vmax.f32 %v1252, %v1119
        %v1257 = vmax.f32 %v1253, %v1122
        %v1258 = vmax.f32 %v1254, %v1124
        %v1259 = vmax.f32 %v1255, %v1256
        %v1260 = vmax.f32 %v1257, %v1258
        %v1261 = vmax.f32 %v1259, %v1260
        %v1262 = vrot.slane %v1261, 4
        %v1263 = vmax.f32 %v1261, %v1262
        %v1264 = vrot.slane %v1263, 2
        %v1265 = vmax.f32 %v1263, %v1264
        %v1266 = vrot.slane %v1265, 1
        %v1267 = vmax.f32 %v1265, %v1266
        %v1268 = vmax.f32 %v1198, %v1267
        %v1269 = vld [vmem:[#allocation3] sm:$0x1]
        %v1270 = vsub.f32 %v1198, %v1268
        %v1271 = vmul.f32 %v1270, 1.442695
        %v1272 = vpow.pop %v1271
        %v1273 = vmul.f32 %v1269, %v1272
        %v1275 = vperm.slane %v1268, 0
        %v1277 = vsub.f32 %v967, %v1275
        %v1278 = vsub.f32 %v969, %v1275
        %v1279 = vsub.f32 %v972, %v1275
        %v1280 = vsub.f32 %v974, %v1275
        %v1281 = vsub.f32 %v977, %v1275
        %v1282 = vsub.f32 %v979, %v1275
        %v1283 = vsub.f32 %v982, %v1275
        %v1284 = vsub.f32 %v984, %v1275
        %v1285 = vsub.f32 %v987, %v1275
        %v1286 = vsub.f32 %v989, %v1275
        %v1287 = vsub.f32 %v992, %v1275
        %v1288 = vsub.f32 %v994, %v1275
        %v1289 = vsub.f32 %v997, %v1275
        %v1290 = vsub.f32 %v999, %v1275
        %v1291 = vsub.f32 %v1002, %v1275
        %v1292 = vsub.f32 %v1004, %v1275
        %v1293 = vsub.f32 %v1007, %v1275
        %v1294 = vsub.f32 %v1009, %v1275
        %v1295 = vsub.f32 %v1012, %v1275
        %v1296 = vsub.f32 %v1014, %v1275
        %v1297 = vsub.f32 %v1017, %v1275
        %v1298 = vsub.f32 %v1019, %v1275
        %v1299 = vsub.f32 %v1022, %v1275
        %v1300 = vsub.f32 %v1024, %v1275
        %v1301 = vsub.f32 %v1027, %v1275
        %v1302 = vsub.f32 %v1029, %v1275
        %v1303 = vsub.f32 %v1032, %v1275
        %v1304 = vsub.f32 %v1034, %v1275
        %v1305 = vsub.f32 %v1037, %v1275
        %v1306 = vsub.f32 %v1039, %v1275
        %v1307 = vsub.f32 %v1042, %v1275
        %v1308 = vsub.f32 %v1044, %v1275
        %v1309 = vsub.f32 %v1047, %v1275
        %v1310 = vsub.f32 %v1049, %v1275
        %v1311 = vsub.f32 %v1052, %v1275
        %v1312 = vsub.f32 %v1054, %v1275
        %v1313 = vsub.f32 %v1057, %v1275
        %v1314 = vsub.f32 %v1059, %v1275
        %v1315 = vsub.f32 %v1062, %v1275
        %v1316 = vsub.f32 %v1064, %v1275
        %v1317 = vsub.f32 %v1067, %v1275
        %v1318 = vsub.f32 %v1069, %v1275
        %v1319 = vsub.f32 %v1072, %v1275
        %v1320 = vsub.f32 %v1074, %v1275
        %v1321 = vsub.f32 %v1077, %v1275
        %v1322 = vsub.f32 %v1079, %v1275
        %v1323 = vsub.f32 %v1082, %v1275
        %v1324 = vsub.f32 %v1084, %v1275
        %v1325 = vsub.f32 %v1087, %v1275
        %v1326 = vsub.f32 %v1089, %v1275
        %v1327 = vsub.f32 %v1092, %v1275
        %v1328 = vsub.f32 %v1094, %v1275
        %v1329 = vsub.f32 %v1097, %v1275
        %v1330 = vsub.f32 %v1099, %v1275
        %v1331 = vsub.f32 %v1102, %v1275
        %v1332 = vsub.f32 %v1104, %v1275
        %v1333 = vsub.f32 %v1107, %v1275
        %v1334 = vsub.f32 %v1109, %v1275
        %v1335 = vsub.f32 %v1112, %v1275
        %v1336 = vsub.f32 %v1114, %v1275
        %v1337 = vsub.f32 %v1117, %v1275
        %v1338 = vsub.f32 %v1119, %v1275
        %v1339 = vsub.f32 %v1122, %v1275
        %v1340 = vsub.f32 %v1124, %v1275
        %v1341 = vmul.f32 %v1277, 1.442695
        %v1342 = vpow.pop %v1341
        %v1343 = vmul.f32 %v1278, 1.442695
        %v1344 = vpow.pop %v1343
        %v1345 = vmul.f32 %v1279, 1.442695
        %v1346 = vpow.pop %v1345
        %v1347 = vmul.f32 %v1280, 1.442695
        %v1348 = vpow.pop %v1347
        %v1349 = vmul.f32 %v1281, 1.442695
        %v1350 = vpow.pop %v1349
        %v1351 = vmul.f32 %v1282, 1.442695
        %v1352 = vpow.pop %v1351
        %v1353 = vmul.f32 %v1283, 1.442695
        %v1354 = vpow.pop %v1353
        %v1355 = vmul.f32 %v1284, 1.442695
        %v1356 = vpow.pop %v1355
        %v1357 = vmul.f32 %v1285, 1.442695
        %v1358 = vpow.pop %v1357
        %v1359 = vmul.f32 %v1286, 1.442695
        %v1360 = vpow.pop %v1359
        %v1361 = vmul.f32 %v1287, 1.442695
        %v1362 = vpow.pop %v1361
        %v1363 = vmul.f32 %v1288, 1.442695
        %v1364 = vpow.pop %v1363
        %v1365 = vmul.f32 %v1289, 1.442695
        %v1366 = vpow.pop %v1365
        %v1367 = vmul.f32 %v1290, 1.442695
        %v1368 = vpow.pop %v1367
        %v1369 = vmul.f32 %v1291, 1.442695
        %v1370 = vpow.pop %v1369
        %v1371 = vmul.f32 %v1292, 1.442695
        %v1372 = vpow.pop %v1371
        %v1373 = vmul.f32 %v1293, 1.442695
        %v1374 = vpow.pop %v1373
        %v1375 = vmul.f32 %v1294, 1.442695
        %v1376 = vpow.pop %v1375
        %v1377 = vmul.f32 %v1295, 1.442695
        %v1378 = vpow.pop %v1377
        %v1379 = vmul.f32 %v1296, 1.442695
        %v1380 = vpow.pop %v1379
        %v1381 = vmul.f32 %v1297, 1.442695
        %v1382 = vpow.pop %v1381
        %v1383 = vmul.f32 %v1298, 1.442695
        %v1384 = vpow.pop %v1383
        %v1385 = vmul.f32 %v1299, 1.442695
        %v1386 = vpow.pop %v1385
        %v1387 = vmul.f32 %v1300, 1.442695
        %v1388 = vpow.pop %v1387
        %v1389 = vmul.f32 %v1301, 1.442695
        %v1390 = vpow.pop %v1389
        %v1391 = vmul.f32 %v1302, 1.442695
        %v1392 = vpow.pop %v1391
        %v1393 = vmul.f32 %v1303, 1.442695
        %v1394 = vpow.pop %v1393
        %v1395 = vmul.f32 %v1304, 1.442695
        %v1396 = vpow.pop %v1395
        %v1397 = vmul.f32 %v1305, 1.442695
        %v1398 = vpow.pop %v1397
        %v1399 = vmul.f32 %v1306, 1.442695
        %v1400 = vpow.pop %v1399
        %v1401 = vmul.f32 %v1307, 1.442695
        %v1402 = vpow.pop %v1401
        %v1403 = vmul.f32 %v1308, 1.442695
        %v1404 = vpow.pop %v1403
        %v1405 = vmul.f32 %v1309, 1.442695
        %v1406 = vpow.pop %v1405
        %v1407 = vmul.f32 %v1310, 1.442695
        %v1408 = vpow.pop %v1407
        %v1409 = vmul.f32 %v1311, 1.442695
        %v1410 = vpow.pop %v1409
        %v1411 = vmul.f32 %v1312, 1.442695
        %v1412 = vpow.pop %v1411
        %v1413 = vmul.f32 %v1313, 1.442695
        %v1414 = vpow.pop %v1413
        %v1415 = vmul.f32 %v1314, 1.442695
        %v1416 = vpow.pop %v1415
        %v1417 = vmul.f32 %v1315, 1.442695
        %v1418 = vpow.pop %v1417
        %v1419 = vmul.f32 %v1316, 1.442695
        %v1420 = vpow.pop %v1419
        %v1421 = vmul.f32 %v1317, 1.442695
        %v1422 = vpow.pop %v1421
        %v1423 = vmul.f32 %v1318, 1.442695
        %v1424 = vpow.pop %v1423
        %v1425 = vmul.f32 %v1319, 1.442695
        %v1426 = vpow.pop %v1425
        %v1427 = vmul.f32 %v1320, 1.442695
        %v1428 = vpow.pop %v1427
        %v1429 = vmul.f32 %v1321, 1.442695
        %v1430 = vpow.pop %v1429
        %v1431 = vmul.f32 %v1322, 1.442695
        %v1432 = vpow.pop %v1431
        %v1433 = vmul.f32 %v1323, 1.442695
        %v1434 = vpow.pop %v1433
        %v1435 = vmul.f32 %v1324, 1.442695
        %v1436 = vpow.pop %v1435
        %v1437 = vmul.f32 %v1325, 1.442695
        %v1438 = vpow.pop %v1437
        %v1439 = vmul.f32 %v1326, 1.442695
        %v1440 = vpow.pop %v1439
        %v1441 = vmul.f32 %v1327, 1.442695
        %v1442 = vpow.pop %v1441
        %v1443 = vmul.f32 %v1328, 1.442695
        %v1444 = vpow.pop %v1443
        %v1445 = vmul.f32 %v1329, 1.442695
        %v1446 = vpow.pop %v1445
        %v1447 = vmul.f32 %v1330, 1.442695
        %v1448 = vpow.pop %v1447
        %v1449 = vmul.f32 %v1331, 1.442695
        %v1450 = vpow.pop %v1449
        %v1451 = vmul.f32 %v1332, 1.442695
        %v1452 = vpow.pop %v1451
        %v1453 = vmul.f32 %v1333, 1.442695
        %v1454 = vpow.pop %v1453
        %v1455 = vmul.f32 %v1334, 1.442695
        %v1456 = vpow.pop %v1455
        %v1457 = vmul.f32 %v1335, 1.442695
        %v1458 = vpow.pop %v1457
        %v1459 = vmul.f32 %v1336, 1.442695
        %v1460 = vpow.pop %v1459
        %v1461 = vmul.f32 %v1337, 1.442695
        %v1462 = vpow.pop %v1461
        %v1463 = vmul.f32 %v1338, 1.442695
        %v1464 = vpow.pop %v1463
        %v1465 = vmul.f32 %v1339, 1.442695
        %v1466 = vpow.pop %v1465
        %v1467 = vmul.f32 %v1340, 1.442695
        %v1468 = vpow.pop %v1467
        %v1469 = vadd.f32 %v1342, %v1344
        %v1470 = vadd.f32 %v1469, %v1346
        %v1471 = vadd.f32 %v1470, %v1348
        %v1472 = vadd.f32 %v1471, %v1350
        %v1473 = vadd.f32 %v1472, %v1352
        %v1474 = vadd.f32 %v1473, %v1354
        %v1475 = vadd.f32 %v1474, %v1356
        %v1476 = vadd.f32 %v1475, %v1358
        %v1477 = vadd.f32 %v1476, %v1360
        %v1478 = vadd.f32 %v1477, %v1362
        %v1479 = vadd.f32 %v1478, %v1364
        %v1480 = vadd.f32 %v1479, %v1366
        %v1481 = vadd.f32 %v1480, %v1368
        %v1482 = vadd.f32 %v1481, %v1370
        %v1483 = vadd.f32 %v1482, %v1372
        %v1484 = vadd.f32 %v1483, %v1374
        %v1485 = vadd.f32 %v1484, %v1376
        %v1486 = vadd.f32 %v1485, %v1378
        %v1487 = vadd.f32 %v1486, %v1380
        %v1488 = vadd.f32 %v1487, %v1382
        %v1489 = vadd.f32 %v1488, %v1384
        %v1490 = vadd.f32 %v1489, %v1386
        %v1491 = vadd.f32 %v1490, %v1388
        %v1492 = vadd.f32 %v1491, %v1390
        %v1493 = vadd.f32 %v1492, %v1392
        %v1494 = vadd.f32 %v1493, %v1394
        %v1495 = vadd.f32 %v1494, %v1396
        %v1496 = vadd.f32 %v1495, %v1398
        %v1497 = vadd.f32 %v1496, %v1400
        %v1498 = vadd.f32 %v1497, %v1402
        %v1499 = vadd.f32 %v1498, %v1404
        %v1500 = vadd.f32 %v1499, %v1406
        %v1501 = vadd.f32 %v1500, %v1408
        %v1502 = vadd.f32 %v1501, %v1410
        %v1503 = vadd.f32 %v1502, %v1412
        %v1504 = vadd.f32 %v1503, %v1414
        %v1505 = vadd.f32 %v1504, %v1416
        %v1506 = vadd.f32 %v1505, %v1418
        %v1507 = vadd.f32 %v1506, %v1420
        %v1508 = vadd.f32 %v1507, %v1422
        %v1509 = vadd.f32 %v1508, %v1424
        %v1510 = vadd.f32 %v1509, %v1426
        %v1511 = vadd.f32 %v1510, %v1428
        %v1512 = vadd.f32 %v1511, %v1430
        %v1513 = vadd.f32 %v1512, %v1432
        %v1514 = vadd.f32 %v1513, %v1434
        %v1515 = vadd.f32 %v1514, %v1436
        %v1516 = vadd.f32 %v1515, %v1438
        %v1517 = vadd.f32 %v1516, %v1440
        %v1518 = vadd.f32 %v1517, %v1442
        %v1519 = vadd.f32 %v1518, %v1444
        %v1520 = vadd.f32 %v1519, %v1446
        %v1521 = vadd.f32 %v1520, %v1448
        %v1522 = vadd.f32 %v1521, %v1450
        %v1523 = vadd.f32 %v1522, %v1452
        %v1524 = vadd.f32 %v1523, %v1454
        %v1525 = vadd.f32 %v1524, %v1456
        %v1526 = vadd.f32 %v1525, %v1458
        %v1527 = vadd.f32 %v1526, %v1460
        %v1528 = vadd.f32 %v1527, %v1462
        %v1529 = vadd.f32 %v1528, %v1464
        %v1530 = vadd.f32 %v1529, %v1466
        %v1531 = vadd.f32 %v1530, %v1468
        %v1532 = vrot.slane %v1531, 4
        %v1533 = vadd.f32 %v1531, %v1532
        %v1534 = vrot.slane %v1533, 2
        %v1535 = vadd.f32 %v1533, %v1534
        %v1536 = vrot.slane %v1535, 1
        %v1537 = vadd.f32 %v1535, %v1536
        %v1538 = vadd.f32 %v1273, %v1537
        %1539 = vst [vmem:[#allocation3] sm:$0x1] %v1538
        %1540 = vst [vmem:[#allocation2] sm:$0x1] %v1268
        %p1541 = scmp.eq.s32.totalorder %s23, 3
        // Predicated region
        $region37: #{tpu_custom_call.1} parent=31 // pred_check
          %p1542 = pneg %p1541
        $region38: #{tpu_custom_call.1} parent=31 // pred_check_branch
          %1544 = sbr.rel (%p1542) target = $region40
        $region39: #{tpu_custom_call.1} parent=31 // pred_region
          %v1545 = vld [vmem:[#allocation2] sm:$0x1]
          %v1546 = vld [vmem:[#allocation3] sm:$0x1]
          %v1547 = vlog2.pop %v1546
          %v1548 = vmul.f32 %v1547, 0.6931472
          %v1549 = vadd.f32 %v1545, %v1548
          %1550 = vst [vmem:[#allocation4] sm:$0x1] %v1549
        $region40: #{tpu_custom_call.1} parent=31 // pred_fallthru
          _
        // Predicated region
        $region41: #{tpu_custom_call.1} parent=31 // pred_check
          %p1551 = pneg %p126
        $region42: #{tpu_custom_call.1} parent=31 // pred_check_branch
          %1553 = sbr.rel (%p1551) target = $region44
        $region43: #{tpu_custom_call.1} parent=31 // pred_region
          %1555 = vsyncadd [#allocation5], 0
          %s1556 = scalar_lea.hbm %s3, %s22
          %s1558 = sshll.u32 [#allocation4], 4
          %s1559 = int_to_ptr.vmem [resolvable:$true] %s1558
          %s1560 = sshll.u32 %s1556, 4
          %s1561 = int_to_ptr.hbm [resolvable:$true] %s1560
          %1563 = dma.vmem_to_hbm [thread:$0]  %s1559, 16, %s1561, [#allocation5]
        $region44: #{tpu_custom_call.1} parent=31 // pred_fallthru
          _
        // Predicated region
        $region45: #{tpu_custom_call.1} parent=31 // pred_check
          %p1564 = pneg %p152
        $region46: #{tpu_custom_call.1} parent=31 // pred_check_branch
          %1566 = sbr.rel (%p1564) target = $region48
        $region47: #{tpu_custom_call.1} parent=31 // pred_region
          %1568 = vsyncadd [#allocation7], 0
          %s1569 = scalar_lea.hbm %s4, %s22
          %s1571 = sshll.u32 [#allocation6], 4
          %s1572 = int_to_ptr.vmem [resolvable:$true] %s1571
          %s1573 = sshll.u32 %s1569, 4
          %s1574 = int_to_ptr.hbm [resolvable:$true] %s1573
          %1576 = dma.vmem_to_hbm [thread:$0]  %s1572, 16, %s1574, [#allocation7]
        $region48: #{tpu_custom_call.1} parent=31 // pred_fallthru
          _
        // Predicated region
        $region49: #{tpu_custom_call.1} parent=31 // pred_check
          %p1577 = pneg %p126
        $region50: #{tpu_custom_call.1} parent=31 // pred_check_branch
          %1579 = sbr.rel (%p1577) target = $region52
        $region51: #{tpu_custom_call.1} parent=31 // pred_region
          %1581 = dma.done [#allocation5], 16
        $region52: #{tpu_custom_call.1} parent=31 // pred_fallthru
          _
        // Predicated region
        $region53: #{tpu_custom_call.1} parent=31 // pred_check
          %p1582 = pneg %p152
        $region54: #{tpu_custom_call.1} parent=31 // pred_check_branch
          %1584 = sbr.rel (%p1582) target = $region56
        $region55: #{tpu_custom_call.1} parent=31 // pred_region
          %1586 = dma.done [#allocation7], 16
        $region56: #{tpu_custom_call.1} parent=31 // pred_fallthru
          _
      $region32: #{tpu_custom_call.1} parent=5 // pred_fallthru
        _
      %p1587 = scmp.le.s32.totalorder 2, %s13
      // Predicated region
      $region57: #{tpu_custom_call.1} parent=5 // pred_check
        %p1588 = pneg %p1587
      $region58: #{tpu_custom_call.1} parent=5 // pred_check_branch
        %1590 = sbr.rel (%p1588) target = $region60
      $region59: #{tpu_custom_call.1} parent=5 // pred_region
        %s1591 = ssub.s32 %s13, 2
      $region60: #{tpu_custom_call.1} parent=5 // pred_fallthru
        _
    $region6: #{tpu_custom_call.1} parent=1 // loop_footer
      %s17 = sadd.s32 1, %s13
    $region7: #{tpu_custom_call.1} parent=1 // loop_footer_branch
      %12 = sbr.rel target = $region3
    $region8: #{tpu_custom_call.1} parent=1 // loop_exit
      _
    %1592 = vsyncpa [#allocation5], 1
    %s1593 = scalar_lea.sflag [#allocation5], 1
    %1594 = vsyncpa %s1593, 1
    %1595 = vsyncpa [#allocation7], 1

</llo_original>
